<compile_context>
chip_gen: v6e
topology: v6e:2x2x1
jax: 0.10.0
libtpu: 0.0.40
codegen_flags: <defaults>
</compile_context>

<pallas_src>
import functools

import jax
import jax.numpy as jnp
from jax.experimental import pallas as pl
from jax.experimental.pallas import tpu as pltpu


def _round_up(x: int, m: int) -> int:
    return (x + m - 1) // m * m


def _vmem_capacity_bytes() -> int:
    """Physical per-core VMEM, with a conservative fallback (v7x = 64 MiB)."""
    try:
        return int(pltpu.get_tpu_info().vmem_capacity_bytes)
    except Exception:
        return 64 * 1024 * 1024


def _conv1x1_stack_kernel(x_ref, w_ref, b_ref, o_ref, *, num_layers, use_bf16):
    """Push one (C, TP) pixel tile of one image through all fused layers.

    x_ref: (1, C, TP)   activations; pixels on the lane axis
    w_ref: (L, C, C)    per-layer weight in PyTorch (Cout, Cin) orientation
    b_ref: (L, C, 1)    per-layer bias
    o_ref: (1, C, TP)
    """
    h = x_ref[0].astype(jnp.float32)                       # (C, TP) running activation, f32
    # Static unroll: L matmuls feed the MXU back-to-back; intermediates never touch HBM.
    for l in range(num_layers):
        w = w_ref[l]
        if use_bf16:
            h = jnp.dot(w.astype(jnp.bfloat16), h.astype(jnp.bfloat16),
                        preferred_element_type=jnp.float32) + b_ref[l]
        else:
            h = jnp.dot(w.astype(jnp.float32), h,
                        preferred_element_type=jnp.float32) + b_ref[l]
    o_ref[0] = h.astype(o_ref.dtype)


def _run_chunk(x3, w, b, *, tile_p, use_bf16, vmem_limit_bytes):
    """Apply one fused chunk of layers to (N, C, P) activations (P % tile_p == 0)."""
    N, C, P = x3.shape
    Lc = w.shape[0]
    grid = (N, P // tile_p)

    flops = 2 * N * P * C * C * Lc
    bytes_accessed = (2 * N * C * P + Lc * C * (C + 1)) * 4

    kernel = functools.partial(_conv1x1_stack_kernel, num_layers=Lc, use_bf16=use_bf16)

    return pl.pallas_call(
        kernel,
        out_shape=jax.ShapeDtypeStruct((N, C, P), x3.dtype),
        grid_spec=pltpu.PrefetchScalarGridSpec(
            num_scalar_prefetch=0,
            grid=grid,
            in_specs=[
                # Streaming activations: lane-dense pixel tiles, double-buffered.
                pl.BlockSpec((1, C, tile_p), lambda n, p: (n, 0, p)),
                # Weights / bias: constant index -> fetched once; single-buffered.
                pl.BlockSpec((Lc, C, C), lambda n, p: (0, 0, 0),
                             pipeline_mode=pl.Buffered(1)),
                pl.BlockSpec((Lc, C, 1), lambda n, p: (0, 0, 0),
                             pipeline_mode=pl.Buffered(1)),
            ],
            out_specs=pl.BlockSpec((1, C, tile_p), lambda n, p: (n, 0, p)),
        ),
        compiler_params=pltpu.CompilerParams(
            # Both grid axes are independent -> shard across TensorCores on v7x.
            dimension_semantics=("parallel", "parallel"),
            vmem_limit_bytes=vmem_limit_bytes,
        ),
        cost_estimate=pl.CostEstimate(flops=flops, transcendentals=0,
                                      bytes_accessed=bytes_accessed),
        # Reuse the activation buffer for the output (no extra HBM allocation
        # when chaining layer chunks).
        input_output_aliases={0: 0},
    )(x3, w, b.reshape(Lc, C, 1))


def conv1x1_stack(x_nchw, weights, biases, *, tile_p=2048, use_bf16_matmul=False):
    """Forward pass of the PyTorch `conv1x1` module.

    x_nchw:  (N, C, H, W)
    weights: (L, Cout, Cin)  -- Conv2d weights with the 1x1 spatial dims squeezed
    biases:  (L, Cout)
    Returns (N, C, H, W).
    """
    N, C, H, W = x_nchw.shape
    L = weights.shape[0]
    P = H * W

    x3 = x_nchw.reshape(N, C, P)

    # --- pixel tile: multiple of 128 lanes, and >= 4 total grid steps when possible
    if P <= 128:
        TP = P                                             # full extent (lane-rule exempt)
    else:
        p_blocks = pl.cdiv(P, 128)
        want_tiles = max(1, -(-4 // N))                    # ceil(4 / N) pixel tiles / image
        blocks_per_tile = max(1, min(p_blocks // want_tiles, max(1, tile_p // 128)))
        TP = blocks_per_tile * 128
    P_pad = _round_up(P, TP)
    if P_pad != P:
        # Padded pixels accumulate bias garbage but are sliced off at the end.
        x3 = jnp.pad(x3, ((0, 0), (0, 0), (0, P_pad - P)))

    # --- generation-aware VMEM budgeting for layer fusion
    lane = 128
    w_bytes_per_layer = C * _round_up(C, lane) * 4         # (C, C) tile, lane-padded
    b_bytes_per_layer = C * lane * 4                        # (C, 1) tile, lane-padded
    per_layer_bytes = w_bytes_per_layer + b_bytes_per_layer
    act_buf_bytes = 4 * C * TP * 4                          # 2 in + 2 out pipeline buffers
    vmem_usable = (_vmem_capacity_bytes() * 3) // 4         # leave compiler headroom
    weight_budget = max(per_layer_bytes, vmem_usable // 2 - act_buf_bytes)
    layers_per_call = max(1, min(L, weight_budget // per_layer_bytes))
    needed = act_buf_bytes + layers_per_call * per_layer_bytes
    vmem_limit_bytes = int(min(vmem_usable, max(16 << 20, needed + (8 << 20))))

    # Note: if L is split across several pallas_calls (weight budget exceeded),
    # intermediates are rounded back to x.dtype between chunks (exact for f32).
    for s in range(0, L, layers_per_call):
        e = min(L, s + layers_per_call)
        x3 = _run_chunk(x3, weights[s:e], biases[s:e], tile_p=TP,
                        use_bf16=use_bf16_matmul, vmem_limit_bytes=vmem_limit_bytes)

    return x3[:, :, :P].reshape(N, C, H, W)


if __name__ == "__main__":
    # Small shapes consistent with the module defaults (layer=10, channels=32).
    N, C, H, W, L = 2, 32, 16, 16, 10

    key = jax.random.PRNGKey(0)
    kx, kw, kb = jax.random.split(key, 3)
    x = jax.random.normal(kx, (N, C, H, W), dtype=jnp.float32)
    # PyTorch-layout weights (L, Cout, Cin), scaled so activations stay O(1).
    w_torch = jax.random.normal(kw, (L, C, C), dtype=jnp.float32) / jnp.float32(C) ** 0.5
    b = 0.1 * jax.random.normal(kb, (L, C), dtype=jnp.float32)

    fwd = jax.jit(conv1x1_stack)
    out = jax.block_until_ready(fwd(x, w_torch, b))

    # Pure-JAX reference: chain of per-pixel matmuls, NCHW-native.
    ref = x.reshape(N, C, H * W)
    for l in range(L):
        ref = jnp.einsum("oi,nip->nop", w_torch[l], ref) + b[l][None, :, None]
    ref = ref.reshape(N, C, H, W)

    err = float(jnp.max(jnp.abs(out - ref)))
    assert out.shape == x.shape, (out.shape, x.shape)
    assert jnp.allclose(out, ref, rtol=1e-2, atol=1e-2), f"max abs err = {err}"
    print("KERNEL_OK")
</pallas_src>

<mosaic_0001>
module attributes {stable_mosaic.version = 11 : i64} {
  func.func @_conv1x1_stack_kernel(%arg0: i32, %arg1: i32, %arg2: memref<1x32x128xf32, #tpu.memory_space<vmem>>, %arg3: memref<10x32x32xf32, #tpu.memory_space<vmem>>, %arg4: memref<10x32x1xf32, #tpu.memory_space<vmem>>, %arg5: memref<1x32x128xf32, #tpu.memory_space<vmem>>) attributes {dimension_semantics = [#tpu.dimension_semantics<parallel>, #tpu.dimension_semantics<parallel>], iteration_bounds = array<i64: 2, 2>, scalar_prefetch = 0 : i64, scratch_operands = 0 : i64, tpu.core_type = #tpu.core_type<tc>, window_params = [{transform_indices = @transform_0, window_bounds = array<i64: 1, 32, 128>}, {pipeline_mode = #tpu.pipeline_mode<synchronous>, transform_indices = @transform_1, window_bounds = array<i64: 10, 32, 32>}, {pipeline_mode = #tpu.pipeline_mode<synchronous>, transform_indices = @transform_2, window_bounds = array<i64: 10, 32, 1>}, {transform_indices = @transform_3, window_bounds = array<i64: 1, 32, 128>}]} {
    %c0 = arith.constant 0 : index
    %c0_0 = arith.constant 0 : index
    %c0_1 = arith.constant 0 : index
    %0 = vector.load %arg2[%c0, %c0_0, %c0_1] : memref<1x32x128xf32, #tpu.memory_space<vmem>>, vector<1x32x128xf32>
    %1 = vector.shape_cast %0 : vector<1x32x128xf32> to vector<32x128xf32>
    %c0_2 = arith.constant 0 : index
    %c0_3 = arith.constant 0 : index
    %c0_4 = arith.constant 0 : index
    %2 = vector.load %arg3[%c0_2, %c0_3, %c0_4] : memref<10x32x32xf32, #tpu.memory_space<vmem>>, vector<1x32x32xf32>
    %3 = vector.shape_cast %2 : vector<1x32x32xf32> to vector<32x32xf32>
    %cst = arith.constant dense<0.000000e+00> : vector<32x128xf32>
    %4 = tpu.matmul %3, %1, %cst {dimension_numbers = #tpu.dot_dimension_numbers<[1], [0], [0], [1], [0, 0, 1, 1], [], []>} : vector<32x32xf32>, vector<32x128xf32>, vector<32x128xf32> -> vector<32x128xf32>
    %c0_5 = arith.constant 0 : index
    %c0_6 = arith.constant 0 : index
    %c0_7 = arith.constant 0 : index
    %5 = vector.load %arg4[%c0_5, %c0_6, %c0_7] : memref<10x32x1xf32, #tpu.memory_space<vmem>>, vector<1x32x1xf32>
    %6 = vector.shape_cast %5 : vector<1x32x1xf32> to vector<32x1xf32>
    %7 = vector.broadcast %6 : vector<32x1xf32> to vector<32x128xf32>
    %8 = arith.addf %4, %7 : vector<32x128xf32>
    %c1 = arith.constant 1 : index
    %c0_8 = arith.constant 0 : index
    %c0_9 = arith.constant 0 : index
    %9 = vector.load %arg3[%c1, %c0_8, %c0_9] : memref<10x32x32xf32, #tpu.memory_space<vmem>>, vector<1x32x32xf32>
    %10 = vector.shape_cast %9 : vector<1x32x32xf32> to vector<32x32xf32>
    %cst_10 = arith.constant dense<0.000000e+00> : vector<32x128xf32>
    %11 = tpu.matmul %10, %8, %cst_10 {dimension_numbers = #tpu.dot_dimension_numbers<[1], [0], [0], [1], [0, 0, 1, 1], [], []>} : vector<32x32xf32>, vector<32x128xf32>, vector<32x128xf32> -> vector<32x128xf32>
    %c1_11 = arith.constant 1 : index
    %c0_12 = arith.constant 0 : index
    %c0_13 = arith.constant 0 : index
    %12 = vector.load %arg4[%c1_11, %c0_12, %c0_13] : memref<10x32x1xf32, #tpu.memory_space<vmem>>, vector<1x32x1xf32>
    %13 = vector.shape_cast %12 : vector<1x32x1xf32> to vector<32x1xf32>
    %14 = vector.broadcast %13 : vector<32x1xf32> to vector<32x128xf32>
    %15 = arith.addf %11, %14 : vector<32x128xf32>
    %c2 = arith.constant 2 : index
    %c0_14 = arith.constant 0 : index
    %c0_15 = arith.constant 0 : index
    %16 = vector.load %arg3[%c2, %c0_14, %c0_15] : memref<10x32x32xf32, #tpu.memory_space<vmem>>, vector<1x32x32xf32>
    %17 = vector.shape_cast %16 : vector<1x32x32xf32> to vector<32x32xf32>
    %cst_16 = arith.constant dense<0.000000e+00> : vector<32x128xf32>
    %18 = tpu.matmul %17, %15, %cst_16 {dimension_numbers = #tpu.dot_dimension_numbers<[1], [0], [0], [1], [0, 0, 1, 1], [], []>} : vector<32x32xf32>, vector<32x128xf32>, vector<32x128xf32> -> vector<32x128xf32>
    %c2_17 = arith.constant 2 : index
    %c0_18 = arith.constant 0 : index
    %c0_19 = arith.constant 0 : index
    %19 = vector.load %arg4[%c2_17, %c0_18, %c0_19] : memref<10x32x1xf32, #tpu.memory_space<vmem>>, vector<1x32x1xf32>
    %20 = vector.shape_cast %19 : vector<1x32x1xf32> to vector<32x1xf32>
    %21 = vector.broadcast %20 : vector<32x1xf32> to vector<32x128xf32>
    %22 = arith.addf %18, %21 : vector<32x128xf32>
    %c3 = arith.constant 3 : index
    %c0_20 = arith.constant 0 : index
    %c0_21 = arith.constant 0 : index
    %23 = vector.load %arg3[%c3, %c0_20, %c0_21] : memref<10x32x32xf32, #tpu.memory_space<vmem>>, vector<1x32x32xf32>
    %24 = vector.shape_cast %23 : vector<1x32x32xf32> to vector<32x32xf32>
    %cst_22 = arith.constant dense<0.000000e+00> : vector<32x128xf32>
    %25 = tpu.matmul %24, %22, %cst_22 {dimension_numbers = #tpu.dot_dimension_numbers<[1], [0], [0], [1], [0, 0, 1, 1], [], []>} : vector<32x32xf32>, vector<32x128xf32>, vector<32x128xf32> -> vector<32x128xf32>
    %c3_23 = arith.constant 3 : index
    %c0_24 = arith.constant 0 : index
    %c0_25 = arith.constant 0 : index
    %26 = vector.load %arg4[%c3_23, %c0_24, %c0_25] : memref<10x32x1xf32, #tpu.memory_space<vmem>>, vector<1x32x1xf32>
    %27 = vector.shape_cast %26 : vector<1x32x1xf32> to vector<32x1xf32>
    %28 = vector.broadcast %27 : vector<32x1xf32> to vector<32x128xf32>
    %29 = arith.addf %25, %28 : vector<32x128xf32>
    %c4 = arith.constant 4 : index
    %c0_26 = arith.constant 0 : index
    %c0_27 = arith.constant 0 : index
    %30 = vector.load %arg3[%c4, %c0_26, %c0_27] : memref<10x32x32xf32, #tpu.memory_space<vmem>>, vector<1x32x32xf32>
    %31 = vector.shape_cast %30 : vector<1x32x32xf32> to vector<32x32xf32>
    %cst_28 = arith.constant dense<0.000000e+00> : vector<32x128xf32>
    %32 = tpu.matmul %31, %29, %cst_28 {dimension_numbers = #tpu.dot_dimension_numbers<[1], [0], [0], [1], [0, 0, 1, 1], [], []>} : vector<32x32xf32>, vector<32x128xf32>, vector<32x128xf32> -> vector<32x128xf32>
    %c4_29 = arith.constant 4 : index
    %c0_30 = arith.constant 0 : index
    %c0_31 = arith.constant 0 : index
    %33 = vector.load %arg4[%c4_29, %c0_30, %c0_31] : memref<10x32x1xf32, #tpu.memory_space<vmem>>, vector<1x32x1xf32>
    %34 = vector.shape_cast %33 : vector<1x32x1xf32> to vector<32x1xf32>
    %35 = vector.broadcast %34 : vector<32x1xf32> to vector<32x128xf32>
    %36 = arith.addf %32, %35 : vector<32x128xf32>
    %c5 = arith.constant 5 : index
    %c0_32 = arith.constant 0 : index
    %c0_33 = arith.constant 0 : index
    %37 = vector.load %arg3[%c5, %c0_32, %c0_33] : memref<10x32x32xf32, #tpu.memory_space<vmem>>, vector<1x32x32xf32>
    %38 = vector.shape_cast %37 : vector<1x32x32xf32> to vector<32x32xf32>
    %cst_34 = arith.constant dense<0.000000e+00> : vector<32x128xf32>
    %39 = tpu.matmul %38, %36, %cst_34 {dimension_numbers = #tpu.dot_dimension_numbers<[1], [0], [0], [1], [0, 0, 1, 1], [], []>} : vector<32x32xf32>, vector<32x128xf32>, vector<32x128xf32> -> vector<32x128xf32>
    %c5_35 = arith.constant 5 : index
    %c0_36 = arith.constant 0 : index
    %c0_37 = arith.constant 0 : index
    %40 = vector.load %arg4[%c5_35, %c0_36, %c0_37] : memref<10x32x1xf32, #tpu.memory_space<vmem>>, vector<1x32x1xf32>
    %41 = vector.shape_cast %40 : vector<1x32x1xf32> to vector<32x1xf32>
    %42 = vector.broadcast %41 : vector<32x1xf32> to vector<32x128xf32>
    %43 = arith.addf %39, %42 : vector<32x128xf32>
    %c6 = arith.constant 6 : index
    %c0_38 = arith.constant 0 : index
    %c0_39 = arith.constant 0 : index
    %44 = vector.load %arg3[%c6, %c0_38, %c0_39] : memref<10x32x32xf32, #tpu.memory_space<vmem>>, vector<1x32x32xf32>
    %45 = vector.shape_cast %44 : vector<1x32x32xf32> to vector<32x32xf32>
    %cst_40 = arith.constant dense<0.000000e+00> : vector<32x128xf32>
    %46 = tpu.matmul %45, %43, %cst_40 {dimension_numbers = #tpu.dot_dimension_numbers<[1], [0], [0], [1], [0, 0, 1, 1], [], []>} : vector<32x32xf32>, vector<32x128xf32>, vector<32x128xf32> -> vector<32x128xf32>
    %c6_41 = arith.constant 6 : index
    %c0_42 = arith.constant 0 : index
    %c0_43 = arith.constant 0 : index
    %47 = vector.load %arg4[%c6_41, %c0_42, %c0_43] : memref<10x32x1xf32, #tpu.memory_space<vmem>>, vector<1x32x1xf32>
    %48 = vector.shape_cast %47 : vector<1x32x1xf32> to vector<32x1xf32>
    %49 = vector.broadcast %48 : vector<32x1xf32> to vector<32x128xf32>
    %50 = arith.addf %46, %49 : vector<32x128xf32>
    %c7 = arith.constant 7 : index
    %c0_44 = arith.constant 0 : index
    %c0_45 = arith.constant 0 : index
    %51 = vector.load %arg3[%c7, %c0_44, %c0_45] : memref<10x32x32xf32, #tpu.memory_space<vmem>>, vector<1x32x32xf32>
    %52 = vector.shape_cast %51 : vector<1x32x32xf32> to vector<32x32xf32>
    %cst_46 = arith.constant dense<0.000000e+00> : vector<32x128xf32>
    %53 = tpu.matmul %52, %50, %cst_46 {dimension_numbers = #tpu.dot_dimension_numbers<[1], [0], [0], [1], [0, 0, 1, 1], [], []>} : vector<32x32xf32>, vector<32x128xf32>, vector<32x128xf32> -> vector<32x128xf32>
    %c7_47 = arith.constant 7 : index
    %c0_48 = arith.constant 0 : index
    %c0_49 = arith.constant 0 : index
    %54 = vector.load %arg4[%c7_47, %c0_48, %c0_49] : memref<10x32x1xf32, #tpu.memory_space<vmem>>, vector<1x32x1xf32>
    %55 = vector.shape_cast %54 : vector<1x32x1xf32> to vector<32x1xf32>
    %56 = vector.broadcast %55 : vector<32x1xf32> to vector<32x128xf32>
    %57 = arith.addf %53, %56 : vector<32x128xf32>
    %c8 = arith.constant 8 : index
    %c0_50 = arith.constant 0 : index
    %c0_51 = arith.constant 0 : index
    %58 = vector.load %arg3[%c8, %c0_50, %c0_51] : memref<10x32x32xf32, #tpu.memory_space<vmem>>, vector<1x32x32xf32>
    %59 = vector.shape_cast %58 : vector<1x32x32xf32> to vector<32x32xf32>
    %cst_52 = arith.constant dense<0.000000e+00> : vector<32x128xf32>
    %60 = tpu.matmul %59, %57, %cst_52 {dimension_numbers = #tpu.dot_dimension_numbers<[1], [0], [0], [1], [0, 0, 1, 1], [], []>} : vector<32x32xf32>, vector<32x128xf32>, vector<32x128xf32> -> vector<32x128xf32>
    %c8_53 = arith.constant 8 : index
    %c0_54 = arith.constant 0 : index
    %c0_55 = arith.constant 0 : index
    %61 = vector.load %arg4[%c8_53, %c0_54, %c0_55] : memref<10x32x1xf32, #tpu.memory_space<vmem>>, vector<1x32x1xf32>
    %62 = vector.shape_cast %61 : vector<1x32x1xf32> to vector<32x1xf32>
    %63 = vector.broadcast %62 : vector<32x1xf32> to vector<32x128xf32>
    %64 = arith.addf %60, %63 : vector<32x128xf32>
    %c9 = arith.constant 9 : index
    %c0_56 = arith.constant 0 : index
    %c0_57 = arith.constant 0 : index
    %65 = vector.load %arg3[%c9, %c0_56, %c0_57] : memref<10x32x32xf32, #tpu.memory_space<vmem>>, vector<1x32x32xf32>
    %66 = vector.shape_cast %65 : vector<1x32x32xf32> to vector<32x32xf32>
    %cst_58 = arith.constant dense<0.000000e+00> : vector<32x128xf32>
    %67 = tpu.matmul %66, %64, %cst_58 {dimension_numbers = #tpu.dot_dimension_numbers<[1], [0], [0], [1], [0, 0, 1, 1], [], []>} : vector<32x32xf32>, vector<32x128xf32>, vector<32x128xf32> -> vector<32x128xf32>
    %c9_59 = arith.constant 9 : index
    %c0_60 = arith.constant 0 : index
    %c0_61 = arith.constant 0 : index
    %68 = vector.load %arg4[%c9_59, %c0_60, %c0_61] : memref<10x32x1xf32, #tpu.memory_space<vmem>>, vector<1x32x1xf32>
    %69 = vector.shape_cast %68 : vector<1x32x1xf32> to vector<32x1xf32>
    %70 = vector.broadcast %69 : vector<32x1xf32> to vector<32x128xf32>
    %71 = arith.addf %67, %70 : vector<32x128xf32>
    %c0_62 = arith.constant 0 : index
    %c0_63 = arith.constant 0 : index
    %c0_64 = arith.constant 0 : index
    %72 = vector.load %arg5[%c0_62, %c0_63, %c0_64] : memref<1x32x128xf32, #tpu.memory_space<vmem>>, vector<1x32x128xf32>
    %73 = vector.shape_cast %72 : vector<1x32x128xf32> to vector<32x128xf32>
    %74 = vector.shape_cast %71 : vector<32x128xf32> to vector<1x32x128xf32>
    tpu.vector_store %arg5[%c0_62, %c0_63, %c0_64], %74 {strides = array<i32>} : memref<1x32x128xf32, #tpu.memory_space<vmem>>, vector<1x32x128xf32>,
    return
  }
  func.func @transform_0(%arg0: i32, %arg1: i32) -> (i32, i32, i32) {
    %c0_i32 = arith.constant 0 : i32
    %c0_i32_0 = arith.constant 0 : i32
    return %arg0, %c0_i32, %arg1 : i32, i32, i32
  }
  func.func @transform_1(%arg0: i32, %arg1: i32) -> (i32, i32, i32) {
    %c0_i32 = arith.constant 0 : i32
    %c0_i32_0 = arith.constant 0 : i32
    %c0_i32_1 = arith.constant 0 : i32
    %c0_i32_2 = arith.constant 0 : i32
    return %c0_i32, %c0_i32_0, %c0_i32_1 : i32, i32, i32
  }
  func.func @transform_2(%arg0: i32, %arg1: i32) -> (i32, i32, i32) {
    %c0_i32 = arith.constant 0 : i32
    %c0_i32_0 = arith.constant 0 : i32
    %c0_i32_1 = arith.constant 0 : i32
    %c0_i32_2 = arith.constant 0 : i32
    return %c0_i32, %c0_i32_0, %c0_i32_1 : i32, i32, i32
  }
  func.func @transform_3(%arg0: i32, %arg1: i32) -> (i32, i32, i32) {
    %c0_i32 = arith.constant 0 : i32
    %c0_i32_0 = arith.constant 0 : i32
    return %arg0, %c0_i32, %arg1 : i32, i32, i32
  }
}

</mosaic_0001>

<llo_original>
// kernel: conv1x1_stack.1
$region0: #{conv1x1_stack.1}
  #allocation0 [shape = 'u32[]', space=smem, size = 0x4, offset = 0x4, fixed_abs, tag = 'smem constant byte address 0x4 - core index']
  #allocation1 [shape = 'u32[144,128]{1,0:T(1,128)}', space=vmem, size = 0x12000, scoped, tag = 'internal scratch']
  %s0 = inlined_call_operand.vmem [shape: f32[2,32,256], index: 0, kind: input, shape index: {}, may-alias: {0,3}]
  %s1 = inlined_call_operand.vmem [shape: f32[10,32,32], index: 1, kind: input, shape index: {}]
  %s2 = inlined_call_operand.vmem [shape: f32[10,32,1], index: 2, kind: input, shape index: {}]
  %s3 = inlined_call_operand.vmem [shape: f32[2,32,256], index: 3, kind: output, shape index: {}, may-alias: {0,3}]
  %s4 = sld [smem:[#allocation0]]
  $region117: #{conv1x1_stack.1} parent=0
    _
  %s6 = ssub.s32 1, %s4
  %s7 = scalar_select 0, %s6, %s4
  $region1: #{conv1x1_stack.1} parent=0
    #allocation2 [shape = 'u8[32768]{0}', space=vmem, size = 0x8000, scoped, tag = 'input window, operand 0']
    #allocation3 [shape = 'u8[32768]{0}', space=vmem, size = 0x8000, scoped, tag = 'output window, operand 0']
    loop: start=0, step=1, limit=6
    $region2: #{conv1x1_stack.1} parent=1 // loop_pre_header
      _
    $region3: #{conv1x1_stack.1} parent=1 // loop_header
      %s9 = sphi 0, %s13
      %p10 = scmp.ge.s32.totalorder %s9, 6
      %s16 = sphi 0, %s28
      %s17 = sphi 0, %s24
      %s18 = sphi 0, %s16
      %s19 = sphi 0, %s17
      %s20 = sphi 0, %s18
      %s21 = sphi 0, %s19
      %s33 = sphi 0, %s35
      %s36 = sphi 0, %s33
      %s37 = sphi 0, %s36
      %s53 = sphi 0, %s37
      %s57 = sphi 0, %s57
      %s59 = sphi 0, %s57
      %s60 = sphi 0, %s59
      %s74 = sphi 0, %s60
      %s78 = sphi 0, %s78
      %s80 = sphi 0, %s78
      %s81 = sphi 0, %s80
      %s95 = sphi 0, %s81
      %s103 = sphi 0, %s105
      %s106 = sphi 0, %s103
      %s107 = sphi 0, %s106
      %s123 = sphi 0, %s107
    $region4: #{conv1x1_stack.1} parent=1 // loop_header_branch
      %12 = sbr.rel (%p10) target = $region8
    $region5: #{conv1x1_stack.1} parent=1 // loop_body
      %s14 = ssub.s32 %s9, 1
      %s15 = ssub.s32 %s9, 2
      %s22 = sadd.s32 1, %s17
      %p23 = scmp.ge.s32.totalorder %s22, 2
      %s24 = scalar_select %p23, 0, %s22
      %s25 = sadd.s32 1, %s16
      %s26 = scalar_select %p23, %s25, %s16
      %p27 = scmp.ge.s32.totalorder %s26, 2
      %s28 = scalar_select %p27, 0, %s26
      %s29 = ssub.s32 %s16, %s28
      %s30 = ssub.s32 %s17, %s24
      %s31 = sor.u32 %s29, %s30
      %p32 = scmp.eq.s32.totalorder %s31, 0
      %s34 = sadd.s32 %s33, 1
      %s35 = scalar_select %p32, %s33, %s34
      %p38 = pneg %p32
      %p39 = scmp.eq.s32.totalorder %s9, 3
      %p40 = por %p38, %p39
      %p41 = scmp.ne.s32.totalorder %s33, %s36
      %p42 = scmp.eq.s32.totalorder %s9, 0
      %p43 = por %p41, %p42
      %p44 = scmp.ne.s32.totalorder %s33, %s36
      %p45 = scmp.eq.s32.totalorder %s14, 3
      %p46 = por %p44, %p45
      %p47 = scmp.ne.s32.totalorder %s36, %s37
      %p48 = scmp.eq.s32.totalorder %s14, 0
      %p49 = por %p47, %p48
      %p50 = scmp.ne.s32.totalorder %s36, %s37
      %p51 = scmp.eq.s32.totalorder %s15, 3
      %p52 = por %p50, %p51
      %p54 = scmp.ne.s32.totalorder %s37, %s53
      %p55 = scmp.eq.s32.totalorder %s15, 0
      %p56 = por %p54, %p55
      %s58 = sadd.s32 %s57, 1
      %p61 = scmp.eq.s32.totalorder %s9, 3
      %p62 = scmp.ne.s32.totalorder %s57, %s59
      %p63 = scmp.eq.s32.totalorder %s9, 0
      %p64 = por %p62, %p63
      %p65 = scmp.ne.s32.totalorder %s57, %s59
      %p66 = scmp.eq.s32.totalorder %s14, 3
      %p67 = por %p65, %p66
      %p68 = scmp.ne.s32.totalorder %s59, %s60
      %p69 = scmp.eq.s32.totalorder %s14, 0
      %p70 = por %p68, %p69
      %p71 = scmp.ne.s32.totalorder %s59, %s60
      %p72 = scmp.eq.s32.totalorder %s15, 3
      %p73 = por %p71, %p72
      %p75 = scmp.ne.s32.totalorder %s60, %s74
      %p76 = scmp.eq.s32.totalorder %s15, 0
      %p77 = por %p75, %p76
      %s79 = sadd.s32 %s78, 1
      %p82 = scmp.eq.s32.totalorder %s9, 3
      %p83 = scmp.ne.s32.totalorder %s78, %s80
      %p84 = scmp.eq.s32.totalorder %s9, 0
      %p85 = por %p83, %p84
      %p86 = scmp.ne.s32.totalorder %s78, %s80
      %p87 = scmp.eq.s32.totalorder %s14, 3
      %p88 = por %p86, %p87
      %p89 = scmp.ne.s32.totalorder %s80, %s81
      %p90 = scmp.eq.s32.totalorder %s14, 0
      %p91 = por %p89, %p90
      %p92 = scmp.ne.s32.totalorder %s80, %s81
      %p93 = scmp.eq.s32.totalorder %s15, 3
      %p94 = por %p92, %p93
      %p96 = scmp.ne.s32.totalorder %s81, %s95
      %p97 = scmp.eq.s32.totalorder %s15, 0
      %p98 = por %p96, %p97
      %s99 = ssub.s32 %s16, %s28
      %s100 = ssub.s32 %s17, %s24
      %s101 = sor.u32 %s99, %s100
      %p102 = scmp.eq.s32.totalorder %s101, 0
      %s104 = sadd.s32 %s103, 1
      %s105 = scalar_select %p102, %s103, %s104
      %p108 = pneg %p102
      %p109 = scmp.eq.s32.totalorder %s9, 3
      %p110 = por %p108, %p109
      %p111 = scmp.ne.s32.totalorder %s103, %s106
      %p112 = scmp.eq.s32.totalorder %s9, 0
      %p113 = por %p111, %p112
      %p114 = scmp.ne.s32.totalorder %s103, %s106
      %p115 = scmp.eq.s32.totalorder %s14, 3
      %p116 = por %p114, %p115
      %p117 = scmp.ne.s32.totalorder %s106, %s107
      %p118 = scmp.eq.s32.totalorder %s14, 0
      %p119 = por %p117, %p118
      %p120 = scmp.ne.s32.totalorder %s106, %s107
      %p121 = scmp.eq.s32.totalorder %s15, 3
      %p122 = por %p120, %p121
      %p124 = scmp.ne.s32.totalorder %s107, %s123
      %p125 = scmp.eq.s32.totalorder %s15, 0
      %p126 = por %p124, %p125
      %p127 = scmp.le.s32.totalorder 1, %s9
      %p128 = scmp.lt.s32.totalorder %s9, 5
      %p129 = pnand %p127, %p128
      %p130 = pneg %p129
      // Predicated region
      $region9: #{conv1x1_stack.1} parent=5 // pred_check
        _
      $region10: #{conv1x1_stack.1} parent=5 // pred_check_branch
        %132 = sbr.rel (%p129) target = $region12
      $region11: #{conv1x1_stack.1} parent=5 // pred_region
        %s133 = ssub.s32 %s9, 1
        // Predicated region
        $region13: #{conv1x1_stack.1} parent=11 // pred_check
          %p134 = pneg %p70
        $region14: #{conv1x1_stack.1} parent=11 // pred_check_branch
          %136 = sbr.rel (%p134) target = $region16
        $region15: #{conv1x1_stack.1} parent=11 // pred_region
          _
        $region16: #{conv1x1_stack.1} parent=11 // pred_fallthru
          _
        // Predicated region
        $region17: #{conv1x1_stack.1} parent=11 // pred_check
          %p137 = pneg %p91
        $region18: #{conv1x1_stack.1} parent=11 // pred_check_branch
          %139 = sbr.rel (%p137) target = $region20
        $region19: #{conv1x1_stack.1} parent=11 // pred_region
          _
        $region20: #{conv1x1_stack.1} parent=11 // pred_fallthru
          _
      $region12: #{conv1x1_stack.1} parent=5 // pred_fallthru
        _
      %p140 = scmp.lt.s32.totalorder %s9, 4
      // Predicated region
      $region21: #{conv1x1_stack.1} parent=5 // pred_check
        %p141 = pneg %p140
      $region22: #{conv1x1_stack.1} parent=5 // pred_check_branch
        %143 = sbr.rel (%p141) target = $region24
      $region23: #{conv1x1_stack.1} parent=5 // pred_region
        // Predicated region
        $region25: #{conv1x1_stack.1} parent=23 // pred_check
          %p144 = pneg %p43
        $region26: #{conv1x1_stack.1} parent=23 // pred_check_branch
          %146 = sbr.rel (%p144) target = $region28
        $region27: #{conv1x1_stack.1} parent=23 // pred_region
          %s147 = sand.u32 %s33, 1
          %s148 = sand.u32 %s33, 1
          %s149 = smul.addr %s148, 32
          %s150 = scalar_lea.vmem [#allocation2], %s149
          %s151 = smul.addr %s16, 8
          %s152 = sadd.s32 %s17, %s151
          %s153 = smul.addr %s152, 8
          %s154 = scalar_lea.vmem %s0, %s153
          // Predicated region
          $region29: #{conv1x1_stack.1} parent=27 // pred_check
            _
          $region30: #{conv1x1_stack.1} parent=27 // pred_check_branch
            %156 = sbr.rel (0) target = $region32
          $region31: #{conv1x1_stack.1} parent=27 // pred_region
            // Predicated region
            $region33: #{conv1x1_stack.1} parent=31 // pred_check
              _
            $region34: #{conv1x1_stack.1} parent=31 // pred_check_branch
              %158 = sbr.rel (0) target = $region36
            $region35: #{conv1x1_stack.1} parent=31 // pred_region
              // Predicated region
              $region48: #{conv1x1_stack.1} parent=35 // pred_check
                _
              $region49: #{conv1x1_stack.1} parent=35 // pred_check_branch
                %180 = sbr.rel (0) target = $region51
              $region50: #{conv1x1_stack.1} parent=35 // pred_region
                loop: start=0, step=1, limit=1
                $region52: #{conv1x1_stack.1} parent=50 // loop_pre_header
                  _
                $region53: #{conv1x1_stack.1} parent=50 // loop_header
                  %s182 = sphi 0, %s186
                  %p183 = scmp.ge.s32.totalorder %s182, 1
                  %s187 = sphi %s154, %s154
                  %s188 = sphi %s150, %s150
                $region54: #{conv1x1_stack.1} parent=50 // loop_header_branch
                  %185 = sbr.rel (%p183) target = $region58
                $region55: #{conv1x1_stack.1} parent=50 // loop_body
                  %v189 = vld [vmem:[%s187] sm:$0xff]
                  %190 = vst [vmem:[%s188] sm:$0xff] %v189
                  %v191 = vld [vmem:[%s187 + $0x10] sm:$0xff]
                  %192 = vst [vmem:[%s188 + $0x8] sm:$0xff] %v191
                  %v193 = vld [vmem:[%s187 + $0x20] sm:$0xff]
                  %194 = vst [vmem:[%s188 + $0x10] sm:$0xff] %v193
                  %v195 = vld [vmem:[%s187 + $0x30] sm:$0xff]
                  %196 = vst [vmem:[%s188 + $0x18] sm:$0xff] %v195
                $region56: #{conv1x1_stack.1} parent=50 // loop_footer
                  %s186 = sadd.s32 1, %s182
                $region57: #{conv1x1_stack.1} parent=50 // loop_footer_branch
                  %181 = sbr.rel target = $region53
                $region58: #{conv1x1_stack.1} parent=50 // loop_exit
                  _
              $region51: #{conv1x1_stack.1} parent=35 // pred_fallthru
                _
              // Predicated region
              $region59: #{conv1x1_stack.1} parent=35 // pred_check
                _
              $region60: #{conv1x1_stack.1} parent=35 // pred_check_branch
                %198 = sbr.rel target = $region62
              $region61: #{conv1x1_stack.1} parent=35 // pred_region
                _
              $region62: #{conv1x1_stack.1} parent=35 // pred_fallthru
                _
            $region36: #{conv1x1_stack.1} parent=31 // pred_fallthru
              _
            // Predicated region
            $region37: #{conv1x1_stack.1} parent=31 // pred_check
              _
            $region38: #{conv1x1_stack.1} parent=31 // pred_check_branch
              %160 = sbr.rel target = $region40
            $region39: #{conv1x1_stack.1} parent=31 // pred_region
              %s162 = ssub.s32 256, 1
              loop: start=0, step=1, limit=1
              $region41: #{conv1x1_stack.1} parent=39 // loop_pre_header
                _
              $region42: #{conv1x1_stack.1} parent=39 // loop_header
                %s164 = sphi 0, %s168
                %p165 = scmp.ge.s32.totalorder %s164, 1
                %s169 = sphi %s154, %s154
                %s170 = sphi %s150, %s150
              $region43: #{conv1x1_stack.1} parent=39 // loop_header_branch
                %167 = sbr.rel (%p165) target = $region47
              $region44: #{conv1x1_stack.1} parent=39 // loop_body
                %v171 = vld [vmem:[%s169] sm:%s162]
                %172 = vst [vmem:[%s170] sm:%s162] %v171
                %v173 = vld [vmem:[%s169 + $0x10] sm:%s162]
                %174 = vst [vmem:[%s170 + $0x8] sm:%s162] %v173
                %v175 = vld [vmem:[%s169 + $0x20] sm:%s162]
                %176 = vst [vmem:[%s170 + $0x10] sm:%s162] %v175
                %v177 = vld [vmem:[%s169 + $0x30] sm:%s162]
                %178 = vst [vmem:[%s170 + $0x18] sm:%s162] %v177
              $region45: #{conv1x1_stack.1} parent=39 // loop_footer
                %s168 = sadd.s32 1, %s164
              $region46: #{conv1x1_stack.1} parent=39 // loop_footer_branch
                %163 = sbr.rel target = $region42
              $region47: #{conv1x1_stack.1} parent=39 // loop_exit
                _
            $region40: #{conv1x1_stack.1} parent=31 // pred_fallthru
              _
          $region32: #{conv1x1_stack.1} parent=27 // pred_fallthru
            _
          %199 = vnop
        $region28: #{conv1x1_stack.1} parent=23 // pred_fallthru
          _
      $region24: #{conv1x1_stack.1} parent=5 // pred_fallthru
        _
      %p200 = scmp.le.s32.totalorder 1, %s9
      %p201 = scmp.lt.s32.totalorder %s9, 5
      %p202 = pnand %p200, %p201
      %p203 = pneg %p202
      // Predicated region
      $region63: #{conv1x1_stack.1} parent=5 // pred_check
        _
      $region64: #{conv1x1_stack.1} parent=5 // pred_check_branch
        %205 = sbr.rel (%p202) target = $region66
      $region65: #{conv1x1_stack.1} parent=5 // pred_region
        %s206 = ssub.s32 %s9, 1
        %s207 = sand.u32 %s36, 1
        %s208 = sand.u32 %s36, 1
        %s209 = smul.addr %s208, 32
        %s210 = scalar_lea.vmem [#allocation2], %s209
        // Predicated region
        $region67: #{conv1x1_stack.1} parent=65 // pred_check
          %p211 = pneg %p49
        $region68: #{conv1x1_stack.1} parent=65 // pred_check_branch
          %213 = sbr.rel (%p211) target = $region70
        $region69: #{conv1x1_stack.1} parent=65 // pred_region
          _
        $region70: #{conv1x1_stack.1} parent=65 // pred_fallthru
          _
        %s214 = sand.u32 %s36, 1
        %s215 = sand.u32 %s36, 1
        %s216 = smul.addr %s215, 32
        %s217 = scalar_lea.vmem [#allocation2], %s216
        %p218 = pneg %p49
        %p219 = pneg %p46
        %p220 = pneg %p70
        %p221 = pneg %p67
        %p222 = pneg %p91
        %p223 = pneg %p88
        %p224 = pneg %p119
        %p225 = pneg %p116
        %s226 = sand.u32 %s106, 1
        %s227 = sand.u32 %s106, 1
        %s228 = smul.addr %s227, 32
        %s229 = scalar_lea.vmem [#allocation3], %s228
        %v230 = vld [vmem:[%s210] sm:$0xff]
        %v231 = vld [vmem:[%s210 + $0x8] sm:$0xff]
        %v232 = vld [vmem:[%s210 + $0x10] sm:$0xff]
        %v233 = vld [vmem:[%s210 + $0x18] sm:$0xff]
        %v234 = vld [vmem:[%s1] sm:$0xff]
        %v235 = vld [vmem:[%s1 + $0x8] sm:$0xff]
        %v236 = vld [vmem:[%s1 + $0x10] sm:$0xff]
        %v237 = vld [vmem:[%s1 + $0x18] sm:$0xff]
        %v238 = vld [vmem:[%s2] sm:$0xff]
        %v239 = vld [vmem:[%s2 + $0x8] sm:$0xff]
        %v240 = vld [vmem:[%s2 + $0x10] sm:$0xff]
        %v241 = vld [vmem:[%s2 + $0x18] sm:$0xff]
        %243 = vset.pattern.permute.xlu0 0
        %244 = vperm.xlu0 %243, %v238
        %v245 = vpop.permute.xlu0 %244
        %248 = vset.pattern.permute.xlu0 0
        %249 = vperm.xlu0 %248, %v239
        %v250 = vpop.permute.xlu0 %249
        %253 = vset.pattern.permute.xlu0 0
        %254 = vperm.xlu0 %253, %v240
        %v255 = vpop.permute.xlu0 %254
        %258 = vset.pattern.permute.xlu0 0
        %259 = vperm.xlu0 %258, %v241
        %v260 = vpop.permute.xlu0 %259
        %vm262 = vcmask 261120
        %v264 = vsel %vm262, %v234, 0
        %v267 = vsel %vm262, %v235, 0
        %v270 = vsel %vm262, %v236, 0
        %v273 = vsel %vm262, %v237, 0
        %275 = vmatprep.subr.mxu0 0.0
        %276 = vmatpush1.msra.mxu0 0.0
        %277 = vmatprep.subr.mxu0 0.0
        %278 = vmatpush1.msra.mxu0 0.0
        %279 = vmatprep.subr.mxu0 0.0
        %280 = vmatpush1.msra.mxu0 0.0
        %281 = vmatprep.subr.mxu0 0.0
        %282 = vmatpush1.msra.mxu0 0.0
        %283 = vmatprep.subr.mxu0 0.0
        %284 = vmatpush1.msra.mxu0 0.0
        %285 = vmatprep.subr.mxu0 0.0
        %286 = vmatpush1.msra.mxu0 0.0
        %287 = vmatprep.subr.mxu0 0.0
        %288 = vmatpush1.msra.mxu0 0.0
        %289 = vmatprep.subr.mxu0 0.0
        %290 = vmatpush1.msra.mxu0 0.0
        %291 = vmatprep.subr.mxu0 0.0
        %292 = vmatpush1.msra.mxu0 0.0
        %293 = vmatprep.subr.mxu0 0.0
        %294 = vmatpush1.msra.mxu0 0.0
        %295 = vmatprep.subr.mxu0 0.0
        %296 = vmatpush1.msra.mxu0 0.0
        %297 = vmatprep.subr.mxu0 0.0
        %298 = vmatpush1.msra.mxu0 0.0
        %299 = vmatprep.subr.mxu0 0.0
        %300 = vmatpush1.msra.mxu0 %v233
        %301 = vmatprep.subr.mxu0 0.0
        %302 = vmatpush1.msra.mxu0 %v232
        %303 = vmatprep.subr.mxu0 0.0
        %304 = vmatpush1.msra.mxu0 %v231
        %305 = vmatprep.subr.mxu0 0.0
        %306 = vmatpush1.msra.mxu0 %v230
        %307 = vmatprep.subr.mxu0 0.0
        %308 = vmatpush2.msra.mxu0 0.0
        %309 = vmatprep.subr.mxu0 0.0
        %310 = vmatpush2.msra.mxu0 0.0
        %311 = vmatprep.subr.mxu0 0.0
        %312 = vmatpush2.msra.mxu0 0.0
        %313 = vmatprep.subr.mxu0 0.0
        %314 = vmatpush2.msra.mxu0 0.0
        %315 = vmatprep.subr.mxu0 0.0
        %316 = vmatpush2.msra.mxu0 0.0
        %317 = vmatprep.subr.mxu0 0.0
        %318 = vmatpush2.msra.mxu0 0.0
        %319 = vmatprep.subr.mxu0 0.0
        %320 = vmatpush2.msra.mxu0 0.0
        %321 = vmatprep.subr.mxu0 0.0
        %322 = vmatpush2.msra.mxu0 0.0
        %323 = vmatprep.subr.mxu0 0.0
        %324 = vmatpush2.msra.mxu0 0.0
        %325 = vmatprep.subr.mxu0 0.0
        %326 = vmatpush2.msra.mxu0 0.0
        %327 = vmatprep.subr.mxu0 0.0
        %328 = vmatpush2.msra.mxu0 0.0
        %329 = vmatprep.subr.mxu0 0.0
        %330 = vmatpush2.msra.mxu0 0.0
        %331 = vmatprep.subr.mxu0 0.0
        %332 = vmatpush2.msra.mxu0 0.0
        %333 = vmatprep.subr.mxu0 0.0
        %334 = vmatpush2.msra.mxu0 0.0
        %335 = vmatprep.subr.mxu0 0.0
        %336 = vmatpush2.msra.mxu0 0.0
        %337 = vmatprep.subr.mxu0 0.0
        %338 = vmatpush2.msra.mxu0 0.0
        %339 = vmatprep.mubr.f32.mxu0 0.0
        %340 = vmatmul.mubr.f32.gmra.mxu0 %v264
        %v341 = vpop.f32.mrf.mxu0
        %v342 = vadd.f32 %v245, %v341
        %v343 = vpop.f32.mrf.mxu0
        %344 = vmatprep.mubr.f32.mxu0 0.0
        %345 = vmatmul.mubr.f32.gmra.mxu0 %v267
        %v346 = vpop.f32.mrf.mxu0
        %v347 = vadd.f32 %v250, %v346
        %v348 = vpop.f32.mrf.mxu0
        %349 = vmatprep.mubr.f32.mxu0 0.0
        %350 = vmatmul.mubr.f32.gmra.mxu0 %v270
        %v351 = vpop.f32.mrf.mxu0
        %v352 = vadd.f32 %v255, %v351
        %v353 = vpop.f32.mrf.mxu0
        %354 = vmatprep.mubr.f32.mxu0 0.0
        %355 = vmatmul.mubr.f32.gmra.mxu0 %v273
        %v356 = vpop.f32.mrf.mxu0
        %v357 = vadd.f32 %v260, %v356
        %v358 = vpop.f32.mrf.mxu0
        %359 = vdwg.mxu0
        %s360 = scalar_lea.vmem %s1, 32
        %v361 = vld [vmem:[%s360] sm:$0xff]
        %v362 = vld [vmem:[%s360 + $0x8] sm:$0xff]
        %v363 = vld [vmem:[%s360 + $0x10] sm:$0xff]
        %v364 = vld [vmem:[%s360 + $0x18] sm:$0xff]
        %s365 = scalar_lea.vmem %s2, 32
        %v366 = vld [vmem:[%s365] sm:$0xff]
        %v367 = vld [vmem:[%s365 + $0x8] sm:$0xff]
        %v368 = vld [vmem:[%s365 + $0x10] sm:$0xff]
        %v369 = vld [vmem:[%s365 + $0x18] sm:$0xff]
        %371 = vset.pattern.permute.xlu0 0
        %372 = vperm.xlu0 %371, %v366
        %v373 = vpop.permute.xlu0 %372
        %376 = vset.pattern.permute.xlu0 0
        %377 = vperm.xlu0 %376, %v367
        %v378 = vpop.permute.xlu0 %377
        %381 = vset.pattern.permute.xlu0 0
        %382 = vperm.xlu0 %381, %v368
        %v383 = vpop.permute.xlu0 %382
        %386 = vset.pattern.permute.xlu0 0
        %387 = vperm.xlu0 %386, %v369
        %v388 = vpop.permute.xlu0 %387
        %v391 = vsel %vm262, %v361, 0
        %v394 = vsel %vm262, %v362, 0
        %v397 = vsel %vm262, %v363, 0
        %v400 = vsel %vm262, %v364, 0
        %402 = vmatprep.subr.mxu0 0.0
        %403 = vmatpush1.msra.mxu0 0.0
        %404 = vmatprep.subr.mxu0 0.0
        %405 = vmatpush1.msra.mxu0 0.0
        %406 = vmatprep.subr.mxu0 0.0
        %407 = vmatpush1.msra.mxu0 0.0
        %408 = vmatprep.subr.mxu0 0.0
        %409 = vmatpush1.msra.mxu0 0.0
        %410 = vmatprep.subr.mxu0 0.0
        %411 = vmatpush1.msra.mxu0 0.0
        %412 = vmatprep.subr.mxu0 0.0
        %413 = vmatpush1.msra.mxu0 0.0
        %414 = vmatprep.subr.mxu0 0.0
        %415 = vmatpush1.msra.mxu0 0.0
        %416 = vmatprep.subr.mxu0 0.0
        %417 = vmatpush1.msra.mxu0 0.0
        %418 = vmatprep.subr.mxu0 0.0
        %419 = vmatpush1.msra.mxu0 0.0
        %420 = vmatprep.subr.mxu0 0.0
        %421 = vmatpush1.msra.mxu0 0.0
        %422 = vmatprep.subr.mxu0 0.0
        %423 = vmatpush1.msra.mxu0 0.0
        %424 = vmatprep.subr.mxu0 0.0
        %425 = vmatpush1.msra.mxu0 0.0
        %426 = vmatprep.subr.mxu0 0.0
        %427 = vmatpush1.msra.mxu0 %v357
        %428 = vmatprep.subr.mxu0 0.0
        %429 = vmatpush1.msra.mxu0 %v352
        %430 = vmatprep.subr.mxu0 0.0
        %431 = vmatpush1.msra.mxu0 %v347
        %432 = vmatprep.subr.mxu0 0.0
        %433 = vmatpush1.msra.mxu0 %v342
        %434 = vmatprep.subr.mxu0 0.0
        %435 = vmatpush2.msra.mxu0 0.0
        %436 = vmatprep.subr.mxu0 0.0
        %437 = vmatpush2.msra.mxu0 0.0
        %438 = vmatprep.subr.mxu0 0.0
        %439 = vmatpush2.msra.mxu0 0.0
        %440 = vmatprep.subr.mxu0 0.0
        %441 = vmatpush2.msra.mxu0 0.0
        %442 = vmatprep.subr.mxu0 0.0
        %443 = vmatpush2.msra.mxu0 0.0
        %444 = vmatprep.subr.mxu0 0.0
        %445 = vmatpush2.msra.mxu0 0.0
        %446 = vmatprep.subr.mxu0 0.0
        %447 = vmatpush2.msra.mxu0 0.0
        %448 = vmatprep.subr.mxu0 0.0
        %449 = vmatpush2.msra.mxu0 0.0
        %450 = vmatprep.subr.mxu0 0.0
        %451 = vmatpush2.msra.mxu0 0.0
        %452 = vmatprep.subr.mxu0 0.0
        %453 = vmatpush2.msra.mxu0 0.0
        %454 = vmatprep.subr.mxu0 0.0
        %455 = vmatpush2.msra.mxu0 0.0
        %456 = vmatprep.subr.mxu0 0.0
        %457 = vmatpush2.msra.mxu0 0.0
        %458 = vmatprep.subr.mxu0 0.0
        %459 = vmatpush2.msra.mxu0 0.0
        %460 = vmatprep.subr.mxu0 0.0
        %461 = vmatpush2.msra.mxu0 0.0
        %462 = vmatprep.subr.mxu0 0.0
        %463 = vmatpush2.msra.mxu0 0.0
        %464 = vmatprep.subr.mxu0 0.0
        %465 = vmatpush2.msra.mxu0 0.0
        %466 = vmatprep.mubr.f32.mxu0 0.0
        %467 = vmatmul.mubr.f32.gmra.mxu0 %v391
        %v468 = vpop.f32.mrf.mxu0
        %v469 = vadd.f32 %v373, %v468
        %v470 = vpop.f32.mrf.mxu0
        %471 = vmatprep.mubr.f32.mxu0 0.0
        %472 = vmatmul.mubr.f32.gmra.mxu0 %v394
        %v473 = vpop.f32.mrf.mxu0
        %v474 = vadd.f32 %v378, %v473
        %v475 = vpop.f32.mrf.mxu0
        %476 = vmatprep.mubr.f32.mxu0 0.0
        %477 = vmatmul.mubr.f32.gmra.mxu0 %v397
        %v478 = vpop.f32.mrf.mxu0
        %v479 = vadd.f32 %v383, %v478
        %v480 = vpop.f32.mrf.mxu0
        %481 = vmatprep.mubr.f32.mxu0 0.0
        %482 = vmatmul.mubr.f32.gmra.mxu0 %v400
        %v483 = vpop.f32.mrf.mxu0
        %v484 = vadd.f32 %v388, %v483
        %v485 = vpop.f32.mrf.mxu0
        %486 = vdwg.mxu0
        %s487 = scalar_lea.vmem %s1, 64
        %v488 = vld [vmem:[%s487] sm:$0xff]
        %v489 = vld [vmem:[%s487 + $0x8] sm:$0xff]
        %v490 = vld [vmem:[%s487 + $0x10] sm:$0xff]
        %v491 = vld [vmem:[%s487 + $0x18] sm:$0xff]
        %s492 = scalar_lea.vmem %s2, 64
        %v493 = vld [vmem:[%s492] sm:$0xff]
        %v494 = vld [vmem:[%s492 + $0x8] sm:$0xff]
        %v495 = vld [vmem:[%s492 + $0x10] sm:$0xff]
        %v496 = vld [vmem:[%s492 + $0x18] sm:$0xff]
        %498 = vset.pattern.permute.xlu0 0
        %499 = vperm.xlu0 %498, %v493
        %v500 = vpop.permute.xlu0 %499
        %503 = vset.pattern.permute.xlu0 0
        %504 = vperm.xlu0 %503, %v494
        %v505 = vpop.permute.xlu0 %504
        %508 = vset.pattern.permute.xlu0 0
        %509 = vperm.xlu0 %508, %v495
        %v510 = vpop.permute.xlu0 %509
        %513 = vset.pattern.permute.xlu0 0
        %514 = vperm.xlu0 %513, %v496
        %v515 = vpop.permute.xlu0 %514
        %v518 = vsel %vm262, %v488, 0
        %v521 = vsel %vm262, %v489, 0
        %v524 = vsel %vm262, %v490, 0
        %v527 = vsel %vm262, %v491, 0
        %529 = vmatprep.subr.mxu0 0.0
        %530 = vmatpush1.msra.mxu0 0.0
        %531 = vmatprep.subr.mxu0 0.0
        %532 = vmatpush1.msra.mxu0 0.0
        %533 = vmatprep.subr.mxu0 0.0
        %534 = vmatpush1.msra.mxu0 0.0
        %535 = vmatprep.subr.mxu0 0.0
        %536 = vmatpush1.msra.mxu0 0.0
        %537 = vmatprep.subr.mxu0 0.0
        %538 = vmatpush1.msra.mxu0 0.0
        %539 = vmatprep.subr.mxu0 0.0
        %540 = vmatpush1.msra.mxu0 0.0
        %541 = vmatprep.subr.mxu0 0.0
        %542 = vmatpush1.msra.mxu0 0.0
        %543 = vmatprep.subr.mxu0 0.0
        %544 = vmatpush1.msra.mxu0 0.0
        %545 = vmatprep.subr.mxu0 0.0
        %546 = vmatpush1.msra.mxu0 0.0
        %547 = vmatprep.subr.mxu0 0.0
        %548 = vmatpush1.msra.mxu0 0.0
        %549 = vmatprep.subr.mxu0 0.0
        %550 = vmatpush1.msra.mxu0 0.0
        %551 = vmatprep.subr.mxu0 0.0
        %552 = vmatpush1.msra.mxu0 0.0
        %553 = vmatprep.subr.mxu0 0.0
        %554 = vmatpush1.msra.mxu0 %v484
        %555 = vmatprep.subr.mxu0 0.0
        %556 = vmatpush1.msra.mxu0 %v479
        %557 = vmatprep.subr.mxu0 0.0
        %558 = vmatpush1.msra.mxu0 %v474
        %559 = vmatprep.subr.mxu0 0.0
        %560 = vmatpush1.msra.mxu0 %v469
        %561 = vmatprep.subr.mxu0 0.0
        %562 = vmatpush2.msra.mxu0 0.0
        %563 = vmatprep.subr.mxu0 0.0
        %564 = vmatpush2.msra.mxu0 0.0
        %565 = vmatprep.subr.mxu0 0.0
        %566 = vmatpush2.msra.mxu0 0.0
        %567 = vmatprep.subr.mxu0 0.0
        %568 = vmatpush2.msra.mxu0 0.0
        %569 = vmatprep.subr.mxu0 0.0
        %570 = vmatpush2.msra.mxu0 0.0
        %571 = vmatprep.subr.mxu0 0.0
        %572 = vmatpush2.msra.mxu0 0.0
        %573 = vmatprep.subr.mxu0 0.0
        %574 = vmatpush2.msra.mxu0 0.0
        %575 = vmatprep.subr.mxu0 0.0
        %576 = vmatpush2.msra.mxu0 0.0
        %577 = vmatprep.subr.mxu0 0.0
        %578 = vmatpush2.msra.mxu0 0.0
        %579 = vmatprep.subr.mxu0 0.0
        %580 = vmatpush2.msra.mxu0 0.0
        %581 = vmatprep.subr.mxu0 0.0
        %582 = vmatpush2.msra.mxu0 0.0
        %583 = vmatprep.subr.mxu0 0.0
        %584 = vmatpush2.msra.mxu0 0.0
        %585 = vmatprep.subr.mxu0 0.0
        %586 = vmatpush2.msra.mxu0 0.0
        %587 = vmatprep.subr.mxu0 0.0
        %588 = vmatpush2.msra.mxu0 0.0
        %589 = vmatprep.subr.mxu0 0.0
        %590 = vmatpush2.msra.mxu0 0.0
        %591 = vmatprep.subr.mxu0 0.0
        %592 = vmatpush2.msra.mxu0 0.0
        %593 = vmatprep.mubr.f32.mxu0 0.0
        %594 = vmatmul.mubr.f32.gmra.mxu0 %v518
        %v595 = vpop.f32.mrf.mxu0
        %v596 = vadd.f32 %v500, %v595
        %v597 = vpop.f32.mrf.mxu0
        %598 = vmatprep.mubr.f32.mxu0 0.0
        %599 = vmatmul.mubr.f32.gmra.mxu0 %v521
        %v600 = vpop.f32.mrf.mxu0
        %v601 = vadd.f32 %v505, %v600
        %v602 = vpop.f32.mrf.mxu0
        %603 = vmatprep.mubr.f32.mxu0 0.0
        %604 = vmatmul.mubr.f32.gmra.mxu0 %v524
        %v605 = vpop.f32.mrf.mxu0
        %v606 = vadd.f32 %v510, %v605
        %v607 = vpop.f32.mrf.mxu0
        %608 = vmatprep.mubr.f32.mxu0 0.0
        %609 = vmatmul.mubr.f32.gmra.mxu0 %v527
        %v610 = vpop.f32.mrf.mxu0
        %v611 = vadd.f32 %v515, %v610
        %v612 = vpop.f32.mrf.mxu0
        %613 = vdwg.mxu0
        %s614 = scalar_lea.vmem %s1, 96
        %v615 = vld [vmem:[%s614] sm:$0xff]
        %v616 = vld [vmem:[%s614 + $0x8] sm:$0xff]
        %v617 = vld [vmem:[%s614 + $0x10] sm:$0xff]
        %v618 = vld [vmem:[%s614 + $0x18] sm:$0xff]
        %s619 = scalar_lea.vmem %s2, 96
        %v620 = vld [vmem:[%s619] sm:$0xff]
        %v621 = vld [vmem:[%s619 + $0x8] sm:$0xff]
        %v622 = vld [vmem:[%s619 + $0x10] sm:$0xff]
        %v623 = vld [vmem:[%s619 + $0x18] sm:$0xff]
        %625 = vset.pattern.permute.xlu0 0
        %626 = vperm.xlu0 %625, %v620
        %v627 = vpop.permute.xlu0 %626
        %630 = vset.pattern.permute.xlu0 0
        %631 = vperm.xlu0 %630, %v621
        %v632 = vpop.permute.xlu0 %631
        %635 = vset.pattern.permute.xlu0 0
        %636 = vperm.xlu0 %635, %v622
        %v637 = vpop.permute.xlu0 %636
        %640 = vset.pattern.permute.xlu0 0
        %641 = vperm.xlu0 %640, %v623
        %v642 = vpop.permute.xlu0 %641
        %v645 = vsel %vm262, %v615, 0
        %v648 = vsel %vm262, %v616, 0
        %v651 = vsel %vm262, %v617, 0
        %v654 = vsel %vm262, %v618, 0
        %656 = vmatprep.subr.mxu0 0.0
        %657 = vmatpush1.msra.mxu0 0.0
        %658 = vmatprep.subr.mxu0 0.0
        %659 = vmatpush1.msra.mxu0 0.0
        %660 = vmatprep.subr.mxu0 0.0
        %661 = vmatpush1.msra.mxu0 0.0
        %662 = vmatprep.subr.mxu0 0.0
        %663 = vmatpush1.msra.mxu0 0.0
        %664 = vmatprep.subr.mxu0 0.0
        %665 = vmatpush1.msra.mxu0 0.0
        %666 = vmatprep.subr.mxu0 0.0
        %667 = vmatpush1.msra.mxu0 0.0
        %668 = vmatprep.subr.mxu0 0.0
        %669 = vmatpush1.msra.mxu0 0.0
        %670 = vmatprep.subr.mxu0 0.0
        %671 = vmatpush1.msra.mxu0 0.0
        %672 = vmatprep.subr.mxu0 0.0
        %673 = vmatpush1.msra.mxu0 0.0
        %674 = vmatprep.subr.mxu0 0.0
        %675 = vmatpush1.msra.mxu0 0.0
        %676 = vmatprep.subr.mxu0 0.0
        %677 = vmatpush1.msra.mxu0 0.0
        %678 = vmatprep.subr.mxu0 0.0
        %679 = vmatpush1.msra.mxu0 0.0
        %680 = vmatprep.subr.mxu0 0.0
        %681 = vmatpush1.msra.mxu0 %v611
        %682 = vmatprep.subr.mxu0 0.0
        %683 = vmatpush1.msra.mxu0 %v606
        %684 = vmatprep.subr.mxu0 0.0
        %685 = vmatpush1.msra.mxu0 %v601
        %686 = vmatprep.subr.mxu0 0.0
        %687 = vmatpush1.msra.mxu0 %v596
        %688 = vmatprep.subr.mxu0 0.0
        %689 = vmatpush2.msra.mxu0 0.0
        %690 = vmatprep.subr.mxu0 0.0
        %691 = vmatpush2.msra.mxu0 0.0
        %692 = vmatprep.subr.mxu0 0.0
        %693 = vmatpush2.msra.mxu0 0.0
        %694 = vmatprep.subr.mxu0 0.0
        %695 = vmatpush2.msra.mxu0 0.0
        %696 = vmatprep.subr.mxu0 0.0
        %697 = vmatpush2.msra.mxu0 0.0
        %698 = vmatprep.subr.mxu0 0.0
        %699 = vmatpush2.msra.mxu0 0.0
        %700 = vmatprep.subr.mxu0 0.0
        %701 = vmatpush2.msra.mxu0 0.0
        %702 = vmatprep.subr.mxu0 0.0
        %703 = vmatpush2.msra.mxu0 0.0
        %704 = vmatprep.subr.mxu0 0.0
        %705 = vmatpush2.msra.mxu0 0.0
        %706 = vmatprep.subr.mxu0 0.0
        %707 = vmatpush2.msra.mxu0 0.0
        %708 = vmatprep.subr.mxu0 0.0
        %709 = vmatpush2.msra.mxu0 0.0
        %710 = vmatprep.subr.mxu0 0.0
        %711 = vmatpush2.msra.mxu0 0.0
        %712 = vmatprep.subr.mxu0 0.0
        %713 = vmatpush2.msra.mxu0 0.0
        %714 = vmatprep.subr.mxu0 0.0
        %715 = vmatpush2.msra.mxu0 0.0
        %716 = vmatprep.subr.mxu0 0.0
        %717 = vmatpush2.msra.mxu0 0.0
        %718 = vmatprep.subr.mxu0 0.0
        %719 = vmatpush2.msra.mxu0 0.0
        %720 = vmatprep.mubr.f32.mxu0 0.0
        %721 = vmatmul.mubr.f32.gmra.mxu0 %v645
        %v722 = vpop.f32.mrf.mxu0
        %v723 = vadd.f32 %v627, %v722
        %v724 = vpop.f32.mrf.mxu0
        %725 = vmatprep.mubr.f32.mxu0 0.0
        %726 = vmatmul.mubr.f32.gmra.mxu0 %v648
        %v727 = vpop.f32.mrf.mxu0
        %v728 = vadd.f32 %v632, %v727
        %v729 = vpop.f32.mrf.mxu0
        %730 = vmatprep.mubr.f32.mxu0 0.0
        %731 = vmatmul.mubr.f32.gmra.mxu0 %v651
        %v732 = vpop.f32.mrf.mxu0
        %v733 = vadd.f32 %v637, %v732
        %v734 = vpop.f32.mrf.mxu0
        %735 = vmatprep.mubr.f32.mxu0 0.0
        %736 = vmatmul.mubr.f32.gmra.mxu0 %v654
        %v737 = vpop.f32.mrf.mxu0
        %v738 = vadd.f32 %v642, %v737
        %v739 = vpop.f32.mrf.mxu0
        %740 = vdwg.mxu0
        %s741 = scalar_lea.vmem %s1, 128
        %v742 = vld [vmem:[%s741] sm:$0xff]
        %v743 = vld [vmem:[%s741 + $0x8] sm:$0xff]
        %v744 = vld [vmem:[%s741 + $0x10] sm:$0xff]
        %v745 = vld [vmem:[%s741 + $0x18] sm:$0xff]
        %s746 = scalar_lea.vmem %s2, 128
        %v747 = vld [vmem:[%s746] sm:$0xff]
        %v748 = vld [vmem:[%s746 + $0x8] sm:$0xff]
        %v749 = vld [vmem:[%s746 + $0x10] sm:$0xff]
        %v750 = vld [vmem:[%s746 + $0x18] sm:$0xff]
        %752 = vset.pattern.permute.xlu0 0
        %753 = vperm.xlu0 %752, %v747
        %v754 = vpop.permute.xlu0 %753
        %757 = vset.pattern.permute.xlu0 0
        %758 = vperm.xlu0 %757, %v748
        %v759 = vpop.permute.xlu0 %758
        %762 = vset.pattern.permute.xlu0 0
        %763 = vperm.xlu0 %762, %v749
        %v764 = vpop.permute.xlu0 %763
        %767 = vset.pattern.permute.xlu0 0
        %768 = vperm.xlu0 %767, %v750
        %v769 = vpop.permute.xlu0 %768
        %v772 = vsel %vm262, %v742, 0
        %v775 = vsel %vm262, %v743, 0
        %v778 = vsel %vm262, %v744, 0
        %v781 = vsel %vm262, %v745, 0
        %783 = vmatprep.subr.mxu0 0.0
        %784 = vmatpush1.msra.mxu0 0.0
        %785 = vmatprep.subr.mxu0 0.0
        %786 = vmatpush1.msra.mxu0 0.0
        %787 = vmatprep.subr.mxu0 0.0
        %788 = vmatpush1.msra.mxu0 0.0
        %789 = vmatprep.subr.mxu0 0.0
        %790 = vmatpush1.msra.mxu0 0.0
        %791 = vmatprep.subr.mxu0 0.0
        %792 = vmatpush1.msra.mxu0 0.0
        %793 = vmatprep.subr.mxu0 0.0
        %794 = vmatpush1.msra.mxu0 0.0
        %795 = vmatprep.subr.mxu0 0.0
        %796 = vmatpush1.msra.mxu0 0.0
        %797 = vmatprep.subr.mxu0 0.0
        %798 = vmatpush1.msra.mxu0 0.0
        %799 = vmatprep.subr.mxu0 0.0
        %800 = vmatpush1.msra.mxu0 0.0
        %801 = vmatprep.subr.mxu0 0.0
        %802 = vmatpush1.msra.mxu0 0.0
        %803 = vmatprep.subr.mxu0 0.0
        %804 = vmatpush1.msra.mxu0 0.0
        %805 = vmatprep.subr.mxu0 0.0
        %806 = vmatpush1.msra.mxu0 0.0
        %807 = vmatprep.subr.mxu0 0.0
        %808 = vmatpush1.msra.mxu0 %v738
        %809 = vmatprep.subr.mxu0 0.0
        %810 = vmatpush1.msra.mxu0 %v733
        %811 = vmatprep.subr.mxu0 0.0
        %812 = vmatpush1.msra.mxu0 %v728
        %813 = vmatprep.subr.mxu0 0.0
        %814 = vmatpush1.msra.mxu0 %v723
        %815 = vmatprep.subr.mxu0 0.0
        %816 = vmatpush2.msra.mxu0 0.0
        %817 = vmatprep.subr.mxu0 0.0
        %818 = vmatpush2.msra.mxu0 0.0
        %819 = vmatprep.subr.mxu0 0.0
        %820 = vmatpush2.msra.mxu0 0.0
        %821 = vmatprep.subr.mxu0 0.0
        %822 = vmatpush2.msra.mxu0 0.0
        %823 = vmatprep.subr.mxu0 0.0
        %824 = vmatpush2.msra.mxu0 0.0
        %825 = vmatprep.subr.mxu0 0.0
        %826 = vmatpush2.msra.mxu0 0.0
        %827 = vmatprep.subr.mxu0 0.0
        %828 = vmatpush2.msra.mxu0 0.0
        %829 = vmatprep.subr.mxu0 0.0
        %830 = vmatpush2.msra.mxu0 0.0
        %831 = vmatprep.subr.mxu0 0.0
        %832 = vmatpush2.msra.mxu0 0.0
        %833 = vmatprep.subr.mxu0 0.0
        %834 = vmatpush2.msra.mxu0 0.0
        %835 = vmatprep.subr.mxu0 0.0
        %836 = vmatpush2.msra.mxu0 0.0
        %837 = vmatprep.subr.mxu0 0.0
        %838 = vmatpush2.msra.mxu0 0.0
        %839 = vmatprep.subr.mxu0 0.0
        %840 = vmatpush2.msra.mxu0 0.0
        %841 = vmatprep.subr.mxu0 0.0
        %842 = vmatpush2.msra.mxu0 0.0
        %843 = vmatprep.subr.mxu0 0.0
        %844 = vmatpush2.msra.mxu0 0.0
        %845 = vmatprep.subr.mxu0 0.0
        %846 = vmatpush2.msra.mxu0 0.0
        %847 = vmatprep.mubr.f32.mxu0 0.0
        %848 = vmatmul.mubr.f32.gmra.mxu0 %v772
        %v849 = vpop.f32.mrf.mxu0
        %v850 = vadd.f32 %v754, %v849
        %v851 = vpop.f32.mrf.mxu0
        %852 = vmatprep.mubr.f32.mxu0 0.0
        %853 = vmatmul.mubr.f32.gmra.mxu0 %v775
        %v854 = vpop.f32.mrf.mxu0
        %v855 = vadd.f32 %v759, %v854
        %v856 = vpop.f32.mrf.mxu0
        %857 = vmatprep.mubr.f32.mxu0 0.0
        %858 = vmatmul.mubr.f32.gmra.mxu0 %v778
        %v859 = vpop.f32.mrf.mxu0
        %v860 = vadd.f32 %v764, %v859
        %v861 = vpop.f32.mrf.mxu0
        %862 = vmatprep.mubr.f32.mxu0 0.0
        %863 = vmatmul.mubr.f32.gmra.mxu0 %v781
        %v864 = vpop.f32.mrf.mxu0
        %v865 = vadd.f32 %v769, %v864
        %v866 = vpop.f32.mrf.mxu0
        %867 = vdwg.mxu0
        %s868 = scalar_lea.vmem %s1, 160
        %v869 = vld [vmem:[%s868] sm:$0xff]
        %v870 = vld [vmem:[%s868 + $0x8] sm:$0xff]
        %v871 = vld [vmem:[%s868 + $0x10] sm:$0xff]
        %v872 = vld [vmem:[%s868 + $0x18] sm:$0xff]
        %s873 = scalar_lea.vmem %s2, 160
        %v874 = vld [vmem:[%s873] sm:$0xff]
        %v875 = vld [vmem:[%s873 + $0x8] sm:$0xff]
        %v876 = vld [vmem:[%s873 + $0x10] sm:$0xff]
        %v877 = vld [vmem:[%s873 + $0x18] sm:$0xff]
        %879 = vset.pattern.permute.xlu0 0
        %880 = vperm.xlu0 %879, %v874
        %v881 = vpop.permute.xlu0 %880
        %884 = vset.pattern.permute.xlu0 0
        %885 = vperm.xlu0 %884, %v875
        %v886 = vpop.permute.xlu0 %885
        %889 = vset.pattern.permute.xlu0 0
        %890 = vperm.xlu0 %889, %v876
        %v891 = vpop.permute.xlu0 %890
        %894 = vset.pattern.permute.xlu0 0
        %895 = vperm.xlu0 %894, %v877
        %v896 = vpop.permute.xlu0 %895
        %v899 = vsel %vm262, %v869, 0
        %v902 = vsel %vm262, %v870, 0
        %v905 = vsel %vm262, %v871, 0
        %v908 = vsel %vm262, %v872, 0
        %910 = vmatprep.subr.mxu0 0.0
        %911 = vmatpush1.msra.mxu0 0.0
        %912 = vmatprep.subr.mxu0 0.0
        %913 = vmatpush1.msra.mxu0 0.0
        %914 = vmatprep.subr.mxu0 0.0
        %915 = vmatpush1.msra.mxu0 0.0
        %916 = vmatprep.subr.mxu0 0.0
        %917 = vmatpush1.msra.mxu0 0.0
        %918 = vmatprep.subr.mxu0 0.0
        %919 = vmatpush1.msra.mxu0 0.0
        %920 = vmatprep.subr.mxu0 0.0
        %921 = vmatpush1.msra.mxu0 0.0
        %922 = vmatprep.subr.mxu0 0.0
        %923 = vmatpush1.msra.mxu0 0.0
        %924 = vmatprep.subr.mxu0 0.0
        %925 = vmatpush1.msra.mxu0 0.0
        %926 = vmatprep.subr.mxu0 0.0
        %927 = vmatpush1.msra.mxu0 0.0
        %928 = vmatprep.subr.mxu0 0.0
        %929 = vmatpush1.msra.mxu0 0.0
        %930 = vmatprep.subr.mxu0 0.0
        %931 = vmatpush1.msra.mxu0 0.0
        %932 = vmatprep.subr.mxu0 0.0
        %933 = vmatpush1.msra.mxu0 0.0
        %934 = vmatprep.subr.mxu0 0.0
        %935 = vmatpush1.msra.mxu0 %v865
        %936 = vmatprep.subr.mxu0 0.0
        %937 = vmatpush1.msra.mxu0 %v860
        %938 = vmatprep.subr.mxu0 0.0
        %939 = vmatpush1.msra.mxu0 %v855
        %940 = vmatprep.subr.mxu0 0.0
        %941 = vmatpush1.msra.mxu0 %v850
        %942 = vmatprep.subr.mxu0 0.0
        %943 = vmatpush2.msra.mxu0 0.0
        %944 = vmatprep.subr.mxu0 0.0
        %945 = vmatpush2.msra.mxu0 0.0
        %946 = vmatprep.subr.mxu0 0.0
        %947 = vmatpush2.msra.mxu0 0.0
        %948 = vmatprep.subr.mxu0 0.0
        %949 = vmatpush2.msra.mxu0 0.0
        %950 = vmatprep.subr.mxu0 0.0
        %951 = vmatpush2.msra.mxu0 0.0
        %952 = vmatprep.subr.mxu0 0.0
        %953 = vmatpush2.msra.mxu0 0.0
        %954 = vmatprep.subr.mxu0 0.0
        %955 = vmatpush2.msra.mxu0 0.0
        %956 = vmatprep.subr.mxu0 0.0
        %957 = vmatpush2.msra.mxu0 0.0
        %958 = vmatprep.subr.mxu0 0.0
        %959 = vmatpush2.msra.mxu0 0.0
        %960 = vmatprep.subr.mxu0 0.0
        %961 = vmatpush2.msra.mxu0 0.0
        %962 = vmatprep.subr.mxu0 0.0
        %963 = vmatpush2.msra.mxu0 0.0
        %964 = vmatprep.subr.mxu0 0.0
        %965 = vmatpush2.msra.mxu0 0.0
        %966 = vmatprep.subr.mxu0 0.0
        %967 = vmatpush2.msra.mxu0 0.0
        %968 = vmatprep.subr.mxu0 0.0
        %969 = vmatpush2.msra.mxu0 0.0
        %970 = vmatprep.subr.mxu0 0.0
        %971 = vmatpush2.msra.mxu0 0.0
        %972 = vmatprep.subr.mxu0 0.0
        %973 = vmatpush2.msra.mxu0 0.0
        %974 = vmatprep.mubr.f32.mxu0 0.0
        %975 = vmatmul.mubr.f32.gmra.mxu0 %v899
        %v976 = vpop.f32.mrf.mxu0
        %v977 = vadd.f32 %v881, %v976
        %v978 = vpop.f32.mrf.mxu0
        %979 = vmatprep.mubr.f32.mxu0 0.0
        %980 = vmatmul.mubr.f32.gmra.mxu0 %v902
        %v981 = vpop.f32.mrf.mxu0
        %v982 = vadd.f32 %v886, %v981
        %v983 = vpop.f32.mrf.mxu0
        %984 = vmatprep.mubr.f32.mxu0 0.0
        %985 = vmatmul.mubr.f32.gmra.mxu0 %v905
        %v986 = vpop.f32.mrf.mxu0
        %v987 = vadd.f32 %v891, %v986
        %v988 = vpop.f32.mrf.mxu0
        %989 = vmatprep.mubr.f32.mxu0 0.0
        %990 = vmatmul.mubr.f32.gmra.mxu0 %v908
        %v991 = vpop.f32.mrf.mxu0
        %v992 = vadd.f32 %v896, %v991
        %v993 = vpop.f32.mrf.mxu0
        %994 = vdwg.mxu0
        %s995 = scalar_lea.vmem %s1, 192
        %v996 = vld [vmem:[%s995] sm:$0xff]
        %v997 = vld [vmem:[%s995 + $0x8] sm:$0xff]
        %v998 = vld [vmem:[%s995 + $0x10] sm:$0xff]
        %v999 = vld [vmem:[%s995 + $0x18] sm:$0xff]
        %s1000 = scalar_lea.vmem %s2, 192
        %v1001 = vld [vmem:[%s1000] sm:$0xff]
        %v1002 = vld [vmem:[%s1000 + $0x8] sm:$0xff]
        %v1003 = vld [vmem:[%s1000 + $0x10] sm:$0xff]
        %v1004 = vld [vmem:[%s1000 + $0x18] sm:$0xff]
        %1006 = vset.pattern.permute.xlu0 0
        %1007 = vperm.xlu0 %1006, %v1001
        %v1008 = vpop.permute.xlu0 %1007
        %1011 = vset.pattern.permute.xlu0 0
        %1012 = vperm.xlu0 %1011, %v1002
        %v1013 = vpop.permute.xlu0 %1012
        %1016 = vset.pattern.permute.xlu0 0
        %1017 = vperm.xlu0 %1016, %v1003
        %v1018 = vpop.permute.xlu0 %1017
        %1021 = vset.pattern.permute.xlu0 0
        %1022 = vperm.xlu0 %1021, %v1004
        %v1023 = vpop.permute.xlu0 %1022
        %v1026 = vsel %vm262, %v996, 0
        %v1029 = vsel %vm262, %v997, 0
        %v1032 = vsel %vm262, %v998, 0
        %v1035 = vsel %vm262, %v999, 0
        %1037 = vmatprep.subr.mxu0 0.0
        %1038 = vmatpush1.msra.mxu0 0.0
        %1039 = vmatprep.subr.mxu0 0.0
        %1040 = vmatpush1.msra.mxu0 0.0
        %1041 = vmatprep.subr.mxu0 0.0
        %1042 = vmatpush1.msra.mxu0 0.0
        %1043 = vmatprep.subr.mxu0 0.0
        %1044 = vmatpush1.msra.mxu0 0.0
        %1045 = vmatprep.subr.mxu0 0.0
        %1046 = vmatpush1.msra.mxu0 0.0
        %1047 = vmatprep.subr.mxu0 0.0
        %1048 = vmatpush1.msra.mxu0 0.0
        %1049 = vmatprep.subr.mxu0 0.0
        %1050 = vmatpush1.msra.mxu0 0.0
        %1051 = vmatprep.subr.mxu0 0.0
        %1052 = vmatpush1.msra.mxu0 0.0
        %1053 = vmatprep.subr.mxu0 0.0
        %1054 = vmatpush1.msra.mxu0 0.0
        %1055 = vmatprep.subr.mxu0 0.0
        %1056 = vmatpush1.msra.mxu0 0.0
        %1057 = vmatprep.subr.mxu0 0.0
        %1058 = vmatpush1.msra.mxu0 0.0
        %1059 = vmatprep.subr.mxu0 0.0
        %1060 = vmatpush1.msra.mxu0 0.0
        %1061 = vmatprep.subr.mxu0 0.0
        %1062 = vmatpush1.msra.mxu0 %v992
        %1063 = vmatprep.subr.mxu0 0.0
        %1064 = vmatpush1.msra.mxu0 %v987
        %1065 = vmatprep.subr.mxu0 0.0
        %1066 = vmatpush1.msra.mxu0 %v982
        %1067 = vmatprep.subr.mxu0 0.0
        %1068 = vmatpush1.msra.mxu0 %v977
        %1069 = vmatprep.subr.mxu0 0.0
        %1070 = vmatpush2.msra.mxu0 0.0
        %1071 = vmatprep.subr.mxu0 0.0
        %1072 = vmatpush2.msra.mxu0 0.0
        %1073 = vmatprep.subr.mxu0 0.0
        %1074 = vmatpush2.msra.mxu0 0.0
        %1075 = vmatprep.subr.mxu0 0.0
        %1076 = vmatpush2.msra.mxu0 0.0
        %1077 = vmatprep.subr.mxu0 0.0
        %1078 = vmatpush2.msra.mxu0 0.0
        %1079 = vmatprep.subr.mxu0 0.0
        %1080 = vmatpush2.msra.mxu0 0.0
        %1081 = vmatprep.subr.mxu0 0.0
        %1082 = vmatpush2.msra.mxu0 0.0
        %1083 = vmatprep.subr.mxu0 0.0
        %1084 = vmatpush2.msra.mxu0 0.0
        %1085 = vmatprep.subr.mxu0 0.0
        %1086 = vmatpush2.msra.mxu0 0.0
        %1087 = vmatprep.subr.mxu0 0.0
        %1088 = vmatpush2.msra.mxu0 0.0
        %1089 = vmatprep.subr.mxu0 0.0
        %1090 = vmatpush2.msra.mxu0 0.0
        %1091 = vmatprep.subr.mxu0 0.0
        %1092 = vmatpush2.msra.mxu0 0.0
        %1093 = vmatprep.subr.mxu0 0.0
        %1094 = vmatpush2.msra.mxu0 0.0
        %1095 = vmatprep.subr.mxu0 0.0
        %1096 = vmatpush2.msra.mxu0 0.0
        %1097 = vmatprep.subr.mxu0 0.0
        %1098 = vmatpush2.msra.mxu0 0.0
        %1099 = vmatprep.subr.mxu0 0.0
        %1100 = vmatpush2.msra.mxu0 0.0
        %1101 = vmatprep.mubr.f32.mxu0 0.0
        %1102 = vmatmul.mubr.f32.gmra.mxu0 %v1026
        %v1103 = vpop.f32.mrf.mxu0
        %v1104 = vadd.f32 %v1008, %v1103
        %v1105 = vpop.f32.mrf.mxu0
        %1106 = vmatprep.mubr.f32.mxu0 0.0
        %1107 = vmatmul.mubr.f32.gmra.mxu0 %v1029
        %v1108 = vpop.f32.mrf.mxu0
        %v1109 = vadd.f32 %v1013, %v1108
        %v1110 = vpop.f32.mrf.mxu0
        %1111 = vmatprep.mubr.f32.mxu0 0.0
        %1112 = vmatmul.mubr.f32.gmra.mxu0 %v1032
        %v1113 = vpop.f32.mrf.mxu0
        %v1114 = vadd.f32 %v1018, %v1113
        %v1115 = vpop.f32.mrf.mxu0
        %1116 = vmatprep.mubr.f32.mxu0 0.0
        %1117 = vmatmul.mubr.f32.gmra.mxu0 %v1035
        %v1118 = vpop.f32.mrf.mxu0
        %v1119 = vadd.f32 %v1023, %v1118
        %v1120 = vpop.f32.mrf.mxu0
        %1121 = vdwg.mxu0
        %s1122 = scalar_lea.vmem %s1, 224
        %v1123 = vld [vmem:[%s1122] sm:$0xff]
        %v1124 = vld [vmem:[%s1122 + $0x8] sm:$0xff]
        %v1125 = vld [vmem:[%s1122 + $0x10] sm:$0xff]
        %v1126 = vld [vmem:[%s1122 + $0x18] sm:$0xff]
        %s1127 = scalar_lea.vmem %s2, 224
        %v1128 = vld [vmem:[%s1127] sm:$0xff]
        %v1129 = vld [vmem:[%s1127 + $0x8] sm:$0xff]
        %v1130 = vld [vmem:[%s1127 + $0x10] sm:$0xff]
        %v1131 = vld [vmem:[%s1127 + $0x18] sm:$0xff]
        %1133 = vset.pattern.permute.xlu0 0
        %1134 = vperm.xlu0 %1133, %v1128
        %v1135 = vpop.permute.xlu0 %1134
        %1138 = vset.pattern.permute.xlu0 0
        %1139 = vperm.xlu0 %1138, %v1129
        %v1140 = vpop.permute.xlu0 %1139
        %1143 = vset.pattern.permute.xlu0 0
        %1144 = vperm.xlu0 %1143, %v1130
        %v1145 = vpop.permute.xlu0 %1144
        %1148 = vset.pattern.permute.xlu0 0
        %1149 = vperm.xlu0 %1148, %v1131
        %v1150 = vpop.permute.xlu0 %1149
        %v1153 = vsel %vm262, %v1123, 0
        %v1156 = vsel %vm262, %v1124, 0
        %v1159 = vsel %vm262, %v1125, 0
        %v1162 = vsel %vm262, %v1126, 0
        %1164 = vmatprep.subr.mxu0 0.0
        %1165 = vmatpush1.msra.mxu0 0.0
        %1166 = vmatprep.subr.mxu0 0.0
        %1167 = vmatpush1.msra.mxu0 0.0
        %1168 = vmatprep.subr.mxu0 0.0
        %1169 = vmatpush1.msra.mxu0 0.0
        %1170 = vmatprep.subr.mxu0 0.0
        %1171 = vmatpush1.msra.mxu0 0.0
        %1172 = vmatprep.subr.mxu0 0.0
        %1173 = vmatpush1.msra.mxu0 0.0
        %1174 = vmatprep.subr.mxu0 0.0
        %1175 = vmatpush1.msra.mxu0 0.0
        %1176 = vmatprep.subr.mxu0 0.0
        %1177 = vmatpush1.msra.mxu0 0.0
        %1178 = vmatprep.subr.mxu0 0.0
        %1179 = vmatpush1.msra.mxu0 0.0
        %1180 = vmatprep.subr.mxu0 0.0
        %1181 = vmatpush1.msra.mxu0 0.0
        %1182 = vmatprep.subr.mxu0 0.0
        %1183 = vmatpush1.msra.mxu0 0.0
        %1184 = vmatprep.subr.mxu0 0.0
        %1185 = vmatpush1.msra.mxu0 0.0
        %1186 = vmatprep.subr.mxu0 0.0
        %1187 = vmatpush1.msra.mxu0 0.0
        %1188 = vmatprep.subr.mxu0 0.0
        %1189 = vmatpush1.msra.mxu0 %v1119
        %1190 = vmatprep.subr.mxu0 0.0
        %1191 = vmatpush1.msra.mxu0 %v1114
        %1192 = vmatprep.subr.mxu0 0.0
        %1193 = vmatpush1.msra.mxu0 %v1109
        %1194 = vmatprep.subr.mxu0 0.0
        %1195 = vmatpush1.msra.mxu0 %v1104
        %1196 = vmatprep.subr.mxu0 0.0
        %1197 = vmatpush2.msra.mxu0 0.0
        %1198 = vmatprep.subr.mxu0 0.0
        %1199 = vmatpush2.msra.mxu0 0.0
        %1200 = vmatprep.subr.mxu0 0.0
        %1201 = vmatpush2.msra.mxu0 0.0
        %1202 = vmatprep.subr.mxu0 0.0
        %1203 = vmatpush2.msra.mxu0 0.0
        %1204 = vmatprep.subr.mxu0 0.0
        %1205 = vmatpush2.msra.mxu0 0.0
        %1206 = vmatprep.subr.mxu0 0.0
        %1207 = vmatpush2.msra.mxu0 0.0
        %1208 = vmatprep.subr.mxu0 0.0
        %1209 = vmatpush2.msra.mxu0 0.0
        %1210 = vmatprep.subr.mxu0 0.0
        %1211 = vmatpush2.msra.mxu0 0.0
        %1212 = vmatprep.subr.mxu0 0.0
        %1213 = vmatpush2.msra.mxu0 0.0
        %1214 = vmatprep.subr.mxu0 0.0
        %1215 = vmatpush2.msra.mxu0 0.0
        %1216 = vmatprep.subr.mxu0 0.0
        %1217 = vmatpush2.msra.mxu0 0.0
        %1218 = vmatprep.subr.mxu0 0.0
        %1219 = vmatpush2.msra.mxu0 0.0
        %1220 = vmatprep.subr.mxu0 0.0
        %1221 = vmatpush2.msra.mxu0 0.0
        %1222 = vmatprep.subr.mxu0 0.0
        %1223 = vmatpush2.msra.mxu0 0.0
        %1224 = vmatprep.subr.mxu0 0.0
        %1225 = vmatpush2.msra.mxu0 0.0
        %1226 = vmatprep.subr.mxu0 0.0
        %1227 = vmatpush2.msra.mxu0 0.0
        %1228 = vmatprep.mubr.f32.mxu0 0.0
        %1229 = vmatmul.mubr.f32.gmra.mxu0 %v1153
        %v1230 = vpop.f32.mrf.mxu0
        %v1231 = vadd.f32 %v1135, %v1230
        %v1232 = vpop.f32.mrf.mxu0
        %1233 = vmatprep.mubr.f32.mxu0 0.0
        %1234 = vmatmul.mubr.f32.gmra.mxu0 %v1156
        %v1235 = vpop.f32.mrf.mxu0
        %v1236 = vadd.f32 %v1140, %v1235
        %v1237 = vpop.f32.mrf.mxu0
        %1238 = vmatprep.mubr.f32.mxu0 0.0
        %1239 = vmatmul.mubr.f32.gmra.mxu0 %v1159
        %v1240 = vpop.f32.mrf.mxu0
        %v1241 = vadd.f32 %v1145, %v1240
        %v1242 = vpop.f32.mrf.mxu0
        %1243 = vmatprep.mubr.f32.mxu0 0.0
        %1244 = vmatmul.mubr.f32.gmra.mxu0 %v1162
        %v1245 = vpop.f32.mrf.mxu0
        %v1246 = vadd.f32 %v1150, %v1245
        %v1247 = vpop.f32.mrf.mxu0
        %1248 = vdwg.mxu0
        %s1249 = scalar_lea.vmem %s1, 256
        %v1250 = vld [vmem:[%s1249] sm:$0xff]
        %v1251 = vld [vmem:[%s1249 + $0x8] sm:$0xff]
        %v1252 = vld [vmem:[%s1249 + $0x10] sm:$0xff]
        %v1253 = vld [vmem:[%s1249 + $0x18] sm:$0xff]
        %s1254 = scalar_lea.vmem %s2, 256
        %v1255 = vld [vmem:[%s1254] sm:$0xff]
        %v1256 = vld [vmem:[%s1254 + $0x8] sm:$0xff]
        %v1257 = vld [vmem:[%s1254 + $0x10] sm:$0xff]
        %v1258 = vld [vmem:[%s1254 + $0x18] sm:$0xff]
        %1260 = vset.pattern.permute.xlu0 0
        %1261 = vperm.xlu0 %1260, %v1255
        %v1262 = vpop.permute.xlu0 %1261
        %1265 = vset.pattern.permute.xlu0 0
        %1266 = vperm.xlu0 %1265, %v1256
        %v1267 = vpop.permute.xlu0 %1266
        %1270 = vset.pattern.permute.xlu0 0
        %1271 = vperm.xlu0 %1270, %v1257
        %v1272 = vpop.permute.xlu0 %1271
        %1275 = vset.pattern.permute.xlu0 0
        %1276 = vperm.xlu0 %1275, %v1258
        %v1277 = vpop.permute.xlu0 %1276
        %v1280 = vsel %vm262, %v1250, 0
        %v1283 = vsel %vm262, %v1251, 0
        %v1286 = vsel %vm262, %v1252, 0
        %v1289 = vsel %vm262, %v1253, 0
        %1291 = vmatprep.subr.mxu0 0.0
        %1292 = vmatpush1.msra.mxu0 0.0
        %1293 = vmatprep.subr.mxu0 0.0
        %1294 = vmatpush1.msra.mxu0 0.0
        %1295 = vmatprep.subr.mxu0 0.0
        %1296 = vmatpush1.msra.mxu0 0.0
        %1297 = vmatprep.subr.mxu0 0.0
        %1298 = vmatpush1.msra.mxu0 0.0
        %1299 = vmatprep.subr.mxu0 0.0
        %1300 = vmatpush1.msra.mxu0 0.0
        %1301 = vmatprep.subr.mxu0 0.0
        %1302 = vmatpush1.msra.mxu0 0.0
        %1303 = vmatprep.subr.mxu0 0.0
        %1304 = vmatpush1.msra.mxu0 0.0
        %1305 = vmatprep.subr.mxu0 0.0
        %1306 = vmatpush1.msra.mxu0 0.0
        %1307 = vmatprep.subr.mxu0 0.0
        %1308 = vmatpush1.msra.mxu0 0.0
        %1309 = vmatprep.subr.mxu0 0.0
        %1310 = vmatpush1.msra.mxu0 0.0
        %1311 = vmatprep.subr.mxu0 0.0
        %1312 = vmatpush1.msra.mxu0 0.0
        %1313 = vmatprep.subr.mxu0 0.0
        %1314 = vmatpush1.msra.mxu0 0.0
        %1315 = vmatprep.subr.mxu0 0.0
        %1316 = vmatpush1.msra.mxu0 %v1246
        %1317 = vmatprep.subr.mxu0 0.0
        %1318 = vmatpush1.msra.mxu0 %v1241
        %1319 = vmatprep.subr.mxu0 0.0
        %1320 = vmatpush1.msra.mxu0 %v1236
        %1321 = vmatprep.subr.mxu0 0.0
        %1322 = vmatpush1.msra.mxu0 %v1231
        %1323 = vmatprep.subr.mxu0 0.0
        %1324 = vmatpush2.msra.mxu0 0.0
        %1325 = vmatprep.subr.mxu0 0.0
        %1326 = vmatpush2.msra.mxu0 0.0
        %1327 = vmatprep.subr.mxu0 0.0
        %1328 = vmatpush2.msra.mxu0 0.0
        %1329 = vmatprep.subr.mxu0 0.0
        %1330 = vmatpush2.msra.mxu0 0.0
        %1331 = vmatprep.subr.mxu0 0.0
        %1332 = vmatpush2.msra.mxu0 0.0
        %1333 = vmatprep.subr.mxu0 0.0
        %1334 = vmatpush2.msra.mxu0 0.0
        %1335 = vmatprep.subr.mxu0 0.0
        %1336 = vmatpush2.msra.mxu0 0.0
        %1337 = vmatprep.subr.mxu0 0.0
        %1338 = vmatpush2.msra.mxu0 0.0
        %1339 = vmatprep.subr.mxu0 0.0
        %1340 = vmatpush2.msra.mxu0 0.0
        %1341 = vmatprep.subr.mxu0 0.0
        %1342 = vmatpush2.msra.mxu0 0.0
        %1343 = vmatprep.subr.mxu0 0.0
        %1344 = vmatpush2.msra.mxu0 0.0
        %1345 = vmatprep.subr.mxu0 0.0
        %1346 = vmatpush2.msra.mxu0 0.0
        %1347 = vmatprep.subr.mxu0 0.0
        %1348 = vmatpush2.msra.mxu0 0.0
        %1349 = vmatprep.subr.mxu0 0.0
        %1350 = vmatpush2.msra.mxu0 0.0
        %1351 = vmatprep.subr.mxu0 0.0
        %1352 = vmatpush2.msra.mxu0 0.0
        %1353 = vmatprep.subr.mxu0 0.0
        %1354 = vmatpush2.msra.mxu0 0.0
        %1355 = vmatprep.mubr.f32.mxu0 0.0
        %1356 = vmatmul.mubr.f32.gmra.mxu0 %v1280
        %v1357 = vpop.f32.mrf.mxu0
        %v1358 = vadd.f32 %v1262, %v1357
        %v1359 = vpop.f32.mrf.mxu0
        %1360 = vmatprep.mubr.f32.mxu0 0.0
        %1361 = vmatmul.mubr.f32.gmra.mxu0 %v1283
        %v1362 = vpop.f32.mrf.mxu0
        %v1363 = vadd.f32 %v1267, %v1362
        %v1364 = vpop.f32.mrf.mxu0
        %1365 = vmatprep.mubr.f32.mxu0 0.0
        %1366 = vmatmul.mubr.f32.gmra.mxu0 %v1286
        %v1367 = vpop.f32.mrf.mxu0
        %v1368 = vadd.f32 %v1272, %v1367
        %v1369 = vpop.f32.mrf.mxu0
        %1370 = vmatprep.mubr.f32.mxu0 0.0
        %1371 = vmatmul.mubr.f32.gmra.mxu0 %v1289
        %v1372 = vpop.f32.mrf.mxu0
        %v1373 = vadd.f32 %v1277, %v1372
        %v1374 = vpop.f32.mrf.mxu0
        %1375 = vdwg.mxu0
        %s1376 = scalar_lea.vmem %s1, 288
        %v1377 = vld [vmem:[%s1376] sm:$0xff]
        %v1378 = vld [vmem:[%s1376 + $0x8] sm:$0xff]
        %v1379 = vld [vmem:[%s1376 + $0x10] sm:$0xff]
        %v1380 = vld [vmem:[%s1376 + $0x18] sm:$0xff]
        %s1381 = scalar_lea.vmem %s2, 288
        %v1382 = vld [vmem:[%s1381] sm:$0xff]
        %v1383 = vld [vmem:[%s1381 + $0x8] sm:$0xff]
        %v1384 = vld [vmem:[%s1381 + $0x10] sm:$0xff]
        %v1385 = vld [vmem:[%s1381 + $0x18] sm:$0xff]
        %1387 = vset.pattern.permute.xlu0 0
        %1388 = vperm.xlu0 %1387, %v1382
        %v1389 = vpop.permute.xlu0 %1388
        %1392 = vset.pattern.permute.xlu0 0
        %1393 = vperm.xlu0 %1392, %v1383
        %v1394 = vpop.permute.xlu0 %1393
        %1397 = vset.pattern.permute.xlu0 0
        %1398 = vperm.xlu0 %1397, %v1384
        %v1399 = vpop.permute.xlu0 %1398
        %1402 = vset.pattern.permute.xlu0 0
        %1403 = vperm.xlu0 %1402, %v1385
        %v1404 = vpop.permute.xlu0 %1403
        %v1407 = vsel %vm262, %v1377, 0
        %v1410 = vsel %vm262, %v1378, 0
        %v1413 = vsel %vm262, %v1379, 0
        %v1416 = vsel %vm262, %v1380, 0
        %1418 = vmatprep.subr.mxu0 0.0
        %1419 = vmatpush1.msra.mxu0 0.0
        %1420 = vmatprep.subr.mxu0 0.0
        %1421 = vmatpush1.msra.mxu0 0.0
        %1422 = vmatprep.subr.mxu0 0.0
        %1423 = vmatpush1.msra.mxu0 0.0
        %1424 = vmatprep.subr.mxu0 0.0
        %1425 = vmatpush1.msra.mxu0 0.0
        %1426 = vmatprep.subr.mxu0 0.0
        %1427 = vmatpush1.msra.mxu0 0.0
        %1428 = vmatprep.subr.mxu0 0.0
        %1429 = vmatpush1.msra.mxu0 0.0
        %1430 = vmatprep.subr.mxu0 0.0
        %1431 = vmatpush1.msra.mxu0 0.0
        %1432 = vmatprep.subr.mxu0 0.0
        %1433 = vmatpush1.msra.mxu0 0.0
        %1434 = vmatprep.subr.mxu0 0.0
        %1435 = vmatpush1.msra.mxu0 0.0
        %1436 = vmatprep.subr.mxu0 0.0
        %1437 = vmatpush1.msra.mxu0 0.0
        %1438 = vmatprep.subr.mxu0 0.0
        %1439 = vmatpush1.msra.mxu0 0.0
        %1440 = vmatprep.subr.mxu0 0.0
        %1441 = vmatpush1.msra.mxu0 0.0
        %1442 = vmatprep.subr.mxu0 0.0
        %1443 = vmatpush1.msra.mxu0 %v1373
        %1444 = vmatprep.subr.mxu0 0.0
        %1445 = vmatpush1.msra.mxu0 %v1368
        %1446 = vmatprep.subr.mxu0 0.0
        %1447 = vmatpush1.msra.mxu0 %v1363
        %1448 = vmatprep.subr.mxu0 0.0
        %1449 = vmatpush1.msra.mxu0 %v1358
        %1450 = vmatprep.subr.mxu0 0.0
        %1451 = vmatpush2.msra.mxu0 0.0
        %1452 = vmatprep.subr.mxu0 0.0
        %1453 = vmatpush2.msra.mxu0 0.0
        %1454 = vmatprep.subr.mxu0 0.0
        %1455 = vmatpush2.msra.mxu0 0.0
        %1456 = vmatprep.subr.mxu0 0.0
        %1457 = vmatpush2.msra.mxu0 0.0
        %1458 = vmatprep.subr.mxu0 0.0
        %1459 = vmatpush2.msra.mxu0 0.0
        %1460 = vmatprep.subr.mxu0 0.0
        %1461 = vmatpush2.msra.mxu0 0.0
        %1462 = vmatprep.subr.mxu0 0.0
        %1463 = vmatpush2.msra.mxu0 0.0
        %1464 = vmatprep.subr.mxu0 0.0
        %1465 = vmatpush2.msra.mxu0 0.0
        %1466 = vmatprep.subr.mxu0 0.0
        %1467 = vmatpush2.msra.mxu0 0.0
        %1468 = vmatprep.subr.mxu0 0.0
        %1469 = vmatpush2.msra.mxu0 0.0
        %1470 = vmatprep.subr.mxu0 0.0
        %1471 = vmatpush2.msra.mxu0 0.0
        %1472 = vmatprep.subr.mxu0 0.0
        %1473 = vmatpush2.msra.mxu0 0.0
        %1474 = vmatprep.subr.mxu0 0.0
        %1475 = vmatpush2.msra.mxu0 0.0
        %1476 = vmatprep.subr.mxu0 0.0
        %1477 = vmatpush2.msra.mxu0 0.0
        %1478 = vmatprep.subr.mxu0 0.0
        %1479 = vmatpush2.msra.mxu0 0.0
        %1480 = vmatprep.subr.mxu0 0.0
        %1481 = vmatpush2.msra.mxu0 0.0
        %1482 = vmatprep.mubr.f32.mxu0 0.0
        %1483 = vmatmul.mubr.f32.gmra.mxu0 %v1407
        %v1484 = vpop.f32.mrf.mxu0
        %v1485 = vadd.f32 %v1389, %v1484
        %v1486 = vpop.f32.mrf.mxu0
        %1487 = vmatprep.mubr.f32.mxu0 0.0
        %1488 = vmatmul.mubr.f32.gmra.mxu0 %v1410
        %v1489 = vpop.f32.mrf.mxu0
        %v1490 = vadd.f32 %v1394, %v1489
        %v1491 = vpop.f32.mrf.mxu0
        %1492 = vmatprep.mubr.f32.mxu0 0.0
        %1493 = vmatmul.mubr.f32.gmra.mxu0 %v1413
        %v1494 = vpop.f32.mrf.mxu0
        %v1495 = vadd.f32 %v1399, %v1494
        %v1496 = vpop.f32.mrf.mxu0
        %1497 = vmatprep.mubr.f32.mxu0 0.0
        %1498 = vmatmul.mubr.f32.gmra.mxu0 %v1416
        %v1499 = vpop.f32.mrf.mxu0
        %v1500 = vadd.f32 %v1404, %v1499
        %v1501 = vpop.f32.mrf.mxu0
        %1502 = vdwg.mxu0
        %1503 = vst [vmem:[%s229] sm:$0xff] %v1485
        %1504 = vst [vmem:[%s229 + $0x8] sm:$0xff] %v1490
        %1505 = vst [vmem:[%s229 + $0x10] sm:$0xff] %v1495
        %1506 = vst [vmem:[%s229 + $0x18] sm:$0xff] %v1500
        %s1507 = sand.u32 %s106, 1
        %s1508 = sand.u32 %s106, 1
        %s1509 = smul.addr %s1508, 32
        %s1510 = scalar_lea.vmem [#allocation3], %s1509
        // Predicated region
        $region71: #{conv1x1_stack.1} parent=65 // pred_check
          %p1511 = pneg %p116
        $region72: #{conv1x1_stack.1} parent=65 // pred_check_branch
          %1513 = sbr.rel (%p1511) target = $region74
        $region73: #{conv1x1_stack.1} parent=65 // pred_region
          %s1514 = smul.addr %s18, 8
          %s1515 = sadd.s32 %s19, %s1514
          %s1516 = smul.addr %s1515, 8
          %s1517 = scalar_lea.vmem %s3, %s1516
          // Predicated region
          $region75: #{conv1x1_stack.1} parent=73 // pred_check
            _
          $region76: #{conv1x1_stack.1} parent=73 // pred_check_branch
            %1519 = sbr.rel (0) target = $region78
          $region77: #{conv1x1_stack.1} parent=73 // pred_region
            // Predicated region
            $region79: #{conv1x1_stack.1} parent=77 // pred_check
              _
            $region80: #{conv1x1_stack.1} parent=77 // pred_check_branch
              %1521 = sbr.rel (0) target = $region82
            $region81: #{conv1x1_stack.1} parent=77 // pred_region
              // Predicated region
              $region94: #{conv1x1_stack.1} parent=81 // pred_check
                _
              $region95: #{conv1x1_stack.1} parent=81 // pred_check_branch
                %1543 = sbr.rel (0) target = $region97
              $region96: #{conv1x1_stack.1} parent=81 // pred_region
                loop: start=0, step=1, limit=1
                $region98: #{conv1x1_stack.1} parent=96 // loop_pre_header
                  _
                $region99: #{conv1x1_stack.1} parent=96 // loop_header
                  %s1545 = sphi 0, %s1549
                  %p1546 = scmp.ge.s32.totalorder %s1545, 1
                  %s1550 = sphi %s1510, %s1510
                  %s1551 = sphi %s1517, %s1517
                $region100: #{conv1x1_stack.1} parent=96 // loop_header_branch
                  %1548 = sbr.rel (%p1546) target = $region104
                $region101: #{conv1x1_stack.1} parent=96 // loop_body
                  %v1552 = vld [vmem:[%s1550] sm:$0xff]
                  %1553 = vst [vmem:[%s1551] sm:$0xff] %v1552
                  %v1554 = vld [vmem:[%s1550 + $0x8] sm:$0xff]
                  %1555 = vst [vmem:[%s1551 + $0x10] sm:$0xff] %v1554
                  %v1556 = vld [vmem:[%s1550 + $0x10] sm:$0xff]
                  %1557 = vst [vmem:[%s1551 + $0x20] sm:$0xff] %v1556
                  %v1558 = vld [vmem:[%s1550 + $0x18] sm:$0xff]
                  %1559 = vst [vmem:[%s1551 + $0x30] sm:$0xff] %v1558
                $region102: #{conv1x1_stack.1} parent=96 // loop_footer
                  %s1549 = sadd.s32 1, %s1545
                $region103: #{conv1x1_stack.1} parent=96 // loop_footer_branch
                  %1544 = sbr.rel target = $region99
                $region104: #{conv1x1_stack.1} parent=96 // loop_exit
                  _
              $region97: #{conv1x1_stack.1} parent=81 // pred_fallthru
                _
              // Predicated region
              $region105: #{conv1x1_stack.1} parent=81 // pred_check
                _
              $region106: #{conv1x1_stack.1} parent=81 // pred_check_branch
                %1561 = sbr.rel target = $region108
              $region107: #{conv1x1_stack.1} parent=81 // pred_region
                _
              $region108: #{conv1x1_stack.1} parent=81 // pred_fallthru
                _
            $region82: #{conv1x1_stack.1} parent=77 // pred_fallthru
              _
            // Predicated region
            $region83: #{conv1x1_stack.1} parent=77 // pred_check
              _
            $region84: #{conv1x1_stack.1} parent=77 // pred_check_branch
              %1523 = sbr.rel target = $region86
            $region85: #{conv1x1_stack.1} parent=77 // pred_region
              %s1525 = ssub.s32 256, 1
              loop: start=0, step=1, limit=1
              $region87: #{conv1x1_stack.1} parent=85 // loop_pre_header
                _
              $region88: #{conv1x1_stack.1} parent=85 // loop_header
                %s1527 = sphi 0, %s1531
                %p1528 = scmp.ge.s32.totalorder %s1527, 1
                %s1532 = sphi %s1510, %s1510
                %s1533 = sphi %s1517, %s1517
              $region89: #{conv1x1_stack.1} parent=85 // loop_header_branch
                %1530 = sbr.rel (%p1528) target = $region93
              $region90: #{conv1x1_stack.1} parent=85 // loop_body
                %v1534 = vld [vmem:[%s1532] sm:%s1525]
                %1535 = vst [vmem:[%s1533] sm:%s1525] %v1534
                %v1536 = vld [vmem:[%s1532 + $0x8] sm:%s1525]
                %1537 = vst [vmem:[%s1533 + $0x10] sm:%s1525] %v1536
                %v1538 = vld [vmem:[%s1532 + $0x10] sm:%s1525]
                %1539 = vst [vmem:[%s1533 + $0x20] sm:%s1525] %v1538
                %v1540 = vld [vmem:[%s1532 + $0x18] sm:%s1525]
                %1541 = vst [vmem:[%s1533 + $0x30] sm:%s1525] %v1540
              $region91: #{conv1x1_stack.1} parent=85 // loop_footer
                %s1531 = sadd.s32 1, %s1527
              $region92: #{conv1x1_stack.1} parent=85 // loop_footer_branch
                %1526 = sbr.rel target = $region88
              $region93: #{conv1x1_stack.1} parent=85 // loop_exit
                _
            $region86: #{conv1x1_stack.1} parent=77 // pred_fallthru
              _
          $region78: #{conv1x1_stack.1} parent=73 // pred_fallthru
            _
          %1562 = vnop
        $region74: #{conv1x1_stack.1} parent=65 // pred_fallthru
          _
      $region66: #{conv1x1_stack.1} parent=5 // pred_fallthru
        _
      %p1563 = scmp.le.s32.totalorder 2, %s9
      // Predicated region
      $region109: #{conv1x1_stack.1} parent=5 // pred_check
        %p1564 = pneg %p1563
      $region110: #{conv1x1_stack.1} parent=5 // pred_check_branch
        %1566 = sbr.rel (%p1564) target = $region112
      $region111: #{conv1x1_stack.1} parent=5 // pred_region
        %s1567 = ssub.s32 %s9, 2
        // Predicated region
        $region113: #{conv1x1_stack.1} parent=111 // pred_check
          %p1568 = pneg %p122
        $region114: #{conv1x1_stack.1} parent=111 // pred_check_branch
          %1570 = sbr.rel (%p1568) target = $region116
        $region115: #{conv1x1_stack.1} parent=111 // pred_region
          %s1571 = sand.u32 %s107, 1
          %s1572 = sand.u32 %s107, 1
          %s1573 = smul.addr %s1572, 32
          %s1574 = scalar_lea.vmem [#allocation3], %s1573
        $region116: #{conv1x1_stack.1} parent=111 // pred_fallthru
          _
      $region112: #{conv1x1_stack.1} parent=5 // pred_fallthru
        _
    $region6: #{conv1x1_stack.1} parent=1 // loop_footer
      %s13 = sadd.s32 1, %s9
    $region7: #{conv1x1_stack.1} parent=1 // loop_footer_branch
      %8 = sbr.rel target = $region3
    $region8: #{conv1x1_stack.1} parent=1 // loop_exit
      _

</llo_original>
